<compile_context>
chip_gen: v7x
topology: tpu7x:2x2x1
jax: 0.10.0
libtpu: 0.0.40
codegen_flags: <defaults>
</compile_context>

<pallas_src>
import math
from functools import partial

import jax
import jax.numpy as jnp
from jax import lax
from jax.experimental import pallas as pl
from jax.experimental.pallas import tpu as pltpu

LN_EPS = 1e-12  # BERT LayerNorm variance epsilon


def bert_attention_kernel(x_ref, mask_ref, q_ref, k_ref, v_ref,
                          wo_ref, bo_ref, gamma_ref, beta_ref,
                          out_ref, *, num_heads: int):
    # x_ref   : (1, TQ, H)            residual input
    # mask_ref: (1, 1, 1, S) f32      additive attention mask
    # q_ref   : (1, NH, TQ, hd) bf16  query, 1/sqrt(hd) already folded in
    # k_ref   : (1, NH, S,  hd) bf16
    # v_ref   : (1, NH, S,  hd) bf16
    # wo_ref  : (NH, hd, H) bf16      output projection, head-major
    # bo/gamma/beta: (1, H) f32
    x_q = x_ref[0].astype(jnp.float32)                               # (TQ, H)
    q = q_ref[0]                                                     # (NH, TQ, hd)
    k = k_ref[0]                                                     # (NH, S,  hd)
    v = v_ref[0]                                                     # (NH, S,  hd)
    mask = mask_ref[0, 0]                                            # (1, S)

    # ---- attention for all heads in one batched MXU dispatch ---------------
    scores = jnp.einsum('nqd,nkd->nqk', q, k,
                        preferred_element_type=jnp.float32)          # (NH, TQ, S)
    scores = scores + mask                                           # broadcast (1,S)
    scores = scores - jnp.max(scores, axis=-1, keepdims=True)
    p = jnp.exp(scores)
    p = p * pl.reciprocal(jnp.sum(p, axis=-1, keepdims=True), approx=True)
    # NOTE: attention-prob dropout is identity in eval mode.

    ctx = jnp.einsum('nqk,nkd->nqd', p.astype(jnp.bfloat16), v,
                     preferred_element_type=jnp.float32)             # (NH, TQ, hd)
    ctx = ctx.astype(jnp.bfloat16)

    # ---- BertSelfOutput: dense (head-major contraction) + residual + LN ----
    # Leading-axis head slices are layout-cheap; each matmul keeps the full
    # H-wide lane output.  No ctx scratch / masked sub-lane stores.
    proj = jnp.dot(ctx[0], wo_ref[0], preferred_element_type=jnp.float32)
    for h in range(1, num_heads):
        proj = proj + jnp.dot(ctx[h], wo_ref[h],
                              preferred_element_type=jnp.float32)    # (TQ, H)

    y = proj + bo_ref[...] + x_q                                     # residual, f32
    mean = jnp.mean(y, axis=-1, keepdims=True)                       # two-pass LN
    centered = y - mean
    var = jnp.mean(centered * centered, axis=-1, keepdims=True)
    out = centered * lax.rsqrt(var + LN_EPS) * gamma_ref[...] + beta_ref[...]
    out_ref[0] = out.astype(out_ref.dtype)


def pack_bert_attention_params(params, num_heads: int):
    """One-time packing: transpose to (in,out), cast to bf16, fold 1/sqrt(hd)."""
    H = params["wq"].shape[0]
    hd = H // num_heads
    scale = 1.0 / math.sqrt(hd)
    f32, bf16 = jnp.float32, jnp.bfloat16
    return {
        "wq": (params["wq"].T * scale).astype(bf16),      # (H, H), scale folded
        "bq": (params["bq"] * scale).astype(f32),
        "wk": params["wk"].T.astype(bf16),
        "bk": params["bk"].astype(f32),
        "wv": params["wv"].T.astype(bf16),
        "bv": params["bv"].astype(f32),
        "wo_hm": params["wo"].T.reshape(num_heads, hd, H).astype(bf16),
        "bo": params["bo"].reshape(1, H).astype(f32),
        "ln_gamma": params["ln_gamma"].reshape(1, H).astype(f32),
        "ln_beta": params["ln_beta"].reshape(1, H).astype(f32),
    }


def bert_attention(hidden_states, attention_mask, packed, *, num_heads: int,
                   q_tile: int = 256):
    """hidden_states: (B, S, H); attention_mask: (B, 1, 1, S) additive.
    `packed` comes from pack_bert_attention_params (call once at load time)."""
    B, S, H = hidden_states.shape
    assert H % num_heads == 0
    hd = H // num_heads

    TQ = min(q_tile, S)
    if S % TQ != 0:  # largest divisor of S not exceeding q_tile
        TQ = next(t for t in range(TQ, 0, -1) if S % t == 0)
    n_q_tiles = S // TQ

    f32, bf16 = jnp.float32, jnp.bfloat16
    mask_f32 = attention_mask.astype(f32)

    # ---- Q/K/V projections as plain XLA GEMMs (uniform kernel step cost) ----
    # NOTE(v5e): hidden_states could also be pre-cast to bf16 at this boundary
    # to halve HBM DMA bytes; kept at input dtype here for residual precision.
    xb = hidden_states.astype(bf16)

    def project(w, b):                                   # -> (B, NH, S, hd) bf16
        y = jnp.dot(xb, w, preferred_element_type=f32) + b
        return y.reshape(B, S, num_heads, hd).transpose(0, 2, 1, 3).astype(bf16)

    q = project(packed["wq"], packed["bq"])              # scale already folded
    k = project(packed["wk"], packed["bk"])
    v = project(packed["wv"], packed["bv"])

    # ---- VMEM budget (double-buffered streamed blocks + in-kernel working set)
    def nbytes(shape, dtype):
        return math.prod(shape) * jnp.dtype(dtype).itemsize

    est = (2 * nbytes((1, TQ, H), hidden_states.dtype)          # x blocks
           + 2 * nbytes((1, 1, 1, S), f32)                      # mask
           + 2 * nbytes((1, num_heads, TQ, hd), bf16)           # q
           + 4 * nbytes((1, num_heads, S, hd), bf16)            # k, v
           + 2 * nbytes((num_heads, hd, H), bf16)               # wo (worst case 2 bufs)
           + 8 * nbytes((1, H), f32)                            # bo/gamma/beta
           + 2 * nbytes((1, TQ, H), hidden_states.dtype)        # out blocks
           + 3 * num_heads * TQ * S * 4                         # scores/probs f32
           + 2 * num_heads * TQ * hd * 4                        # ctx f32
           + 4 * TQ * H * 4)                                    # proj / LN temps
    try:
        vmem_cap = pltpu.get_tpu_info().vmem_capacity_bytes
    except Exception:
        vmem_cap = 64 * 1024 * 1024                             # conservative (v7x)
    vmem_limit = int(min(0.85 * vmem_cap,
                         max(32 * 1024 * 1024, est + (4 << 20))))

    kernel = partial(bert_attention_kernel, num_heads=num_heads)

    def run(single_buffer_consts: bool):
        const_kw = {"pipeline_mode": pl.Buffered(1)} if single_buffer_consts else {}

        def const_spec(shape):
            nz = len(shape)
            return pl.BlockSpec(shape, lambda b, t: (0,) * nz, **const_kw)

        grid_spec = pltpu.PrefetchScalarGridSpec(
            num_scalar_prefetch=0,
            grid=(B, n_q_tiles),
            in_specs=[
                pl.BlockSpec((1, TQ, H), lambda b, t: (b, t, 0)),              # x tile
                pl.BlockSpec((1, 1, 1, S), lambda b, t: (b, 0, 0, 0)),         # mask
                pl.BlockSpec((1, num_heads, TQ, hd), lambda b, t: (b, 0, t, 0)),  # q
                pl.BlockSpec((1, num_heads, S, hd), lambda b, t: (b, 0, 0, 0)),   # k
                pl.BlockSpec((1, num_heads, S, hd), lambda b, t: (b, 0, 0, 0)),   # v
                const_spec((num_heads, hd, H)),                                # Wo
                const_spec((1, H)),                                            # bo
                const_spec((1, H)),                                            # gamma
                const_spec((1, H)),                                            # beta
            ],
            out_specs=pl.BlockSpec((1, TQ, H), lambda b, t: (b, t, 0)),
        )
        return pl.pallas_call(
            kernel,
            out_shape=jax.ShapeDtypeStruct((B, S, H), hidden_states.dtype),
            grid_spec=grid_spec,
            compiler_params=pltpu.CompilerParams(
                # steps are fully independent -> both axes parallel (v7x 2 TCs)
                dimension_semantics=("parallel", "parallel"),
                vmem_limit_bytes=vmem_limit,
            ),
        )(hidden_states, mask_f32, q, k, v,
          packed["wo_hm"], packed["bo"], packed["ln_gamma"], packed["ln_beta"])

    try:
        return run(True)
    except Exception:
        # pl.Buffered(1) on constant blocks not supported by this JAX/Mosaic
        # build -- fall back to default double-buffered BlockSpecs.
        return run(False)


def init_params(key, hidden_size):
    ks = jax.random.split(key, 8)
    std = 0.02
    return {
        "wq": jax.random.normal(ks[0], (hidden_size, hidden_size), jnp.float32) * std,
        "bq": jax.random.normal(ks[1], (hidden_size,), jnp.float32) * std,
        "wk": jax.random.normal(ks[2], (hidden_size, hidden_size), jnp.float32) * std,
        "bk": jax.random.normal(ks[3], (hidden_size,), jnp.float32) * std,
        "wv": jax.random.normal(ks[4], (hidden_size, hidden_size), jnp.float32) * std,
        "bv": jax.random.normal(ks[5], (hidden_size,), jnp.float32) * std,
        "wo": jax.random.normal(ks[6], (hidden_size, hidden_size), jnp.float32) * std,
        "bo": jax.random.normal(ks[7], (hidden_size,), jnp.float32) * std,
        "ln_gamma": jnp.ones((hidden_size,), jnp.float32),
        "ln_beta": jnp.zeros((hidden_size,), jnp.float32),
    }


if __name__ == "__main__":
    B, S, H, NH = 2, 8, 32, 4

    key = jax.random.PRNGKey(0)
    k_x, k_m, k_p = jax.random.split(key, 3)

    hidden_states = jax.random.normal(k_x, (B, S, H), jnp.float32)
    # additive mask: 0 for attend, -10000 for masked (standard BERT convention)
    keep = (jax.random.uniform(k_m, (B, 1, 1, S)) > 0.2).astype(jnp.float32)
    attention_mask = (1.0 - keep) * -10000.0

    params = init_params(k_p, H)
    packed = pack_bert_attention_params(params, NH)     # one-time packing

    out = bert_attention(hidden_states, attention_mask, packed, num_heads=NH)
    out = jax.block_until_ready(out)

    # pure-JAX f32 reference (eval-mode dropout); tolerance covers bf16 MXU inputs
    def ref(x, mask, p):
        q = x @ p["wq"].T + p["bq"]
        k = x @ p["wk"].T + p["bk"]
        v = x @ p["wv"].T + p["bv"]
        hd = H // NH
        split = lambda t: t.reshape(B, S, NH, hd).transpose(0, 2, 1, 3)
        qh, kh, vh = split(q), split(k), split(v)
        scores = jnp.einsum("bhqd,bhkd->bhqk", qh / math.sqrt(hd), kh) + mask
        probs = jax.nn.softmax(scores, axis=-1)
        ctx = jnp.einsum("bhqk,bhkd->bhqd", probs, vh)
        ctx = ctx.transpose(0, 2, 1, 3).reshape(B, S, H)
        proj = ctx @ p["wo"].T + p["bo"]
        y = proj + x
        mu = y.mean(-1, keepdims=True)
        var = ((y - mu) ** 2).mean(-1, keepdims=True)
        return (y - mu) / jnp.sqrt(var + LN_EPS) * p["ln_gamma"] + p["ln_beta"]

    expected = ref(hidden_states, attention_mask, params)
    max_err = float(jnp.max(jnp.abs(out - expected)))
    assert max_err < 2e-2, max_err

    print("KERNEL_OK")
</pallas_src>

<mosaic_0001>
module attributes {stable_mosaic.version = 11 : i64} {
  func.func @bert_attention_kernel(%arg0: i32, %arg1: i32, %arg2: memref<1x8x32xf32, #tpu.memory_space<vmem>>, %arg3: memref<1x1x1x8xf32, #tpu.memory_space<vmem>>, %arg4: memref<1x4x8x8xbf16, #tpu.memory_space<vmem>>, %arg5: memref<1x4x8x8xbf16, #tpu.memory_space<vmem>>, %arg6: memref<1x4x8x8xbf16, #tpu.memory_space<vmem>>, %arg7: memref<4x8x32xbf16, #tpu.memory_space<vmem>>, %arg8: memref<1x32xf32, #tpu.memory_space<vmem>>, %arg9: memref<1x32xf32, #tpu.memory_space<vmem>>, %arg10: memref<1x32xf32, #tpu.memory_space<vmem>>, %arg11: memref<1x8x32xf32, #tpu.memory_space<vmem>>) attributes {dimension_semantics = [#tpu.dimension_semantics<parallel>, #tpu.dimension_semantics<parallel>], iteration_bounds = array<i64: 2, 1>, scalar_prefetch = 0 : i64, scratch_operands = 0 : i64, tpu.core_type = #tpu.core_type<tc>, window_params = [{transform_indices = @transform_0, window_bounds = array<i64: 1, 8, 32>}, {transform_indices = @transform_1, window_bounds = array<i64: 1, 1, 1, 8>}, {transform_indices = @transform_2, window_bounds = array<i64: 1, 4, 8, 8>}, {transform_indices = @transform_3, window_bounds = array<i64: 1, 4, 8, 8>}, {transform_indices = @transform_4, window_bounds = array<i64: 1, 4, 8, 8>}, {pipeline_mode = #tpu.pipeline_mode<synchronous>, transform_indices = @transform_5, window_bounds = array<i64: 4, 8, 32>}, {pipeline_mode = #tpu.pipeline_mode<synchronous>, transform_indices = @transform_6, window_bounds = array<i64: 1, 32>}, {pipeline_mode = #tpu.pipeline_mode<synchronous>, transform_indices = @transform_7, window_bounds = array<i64: 1, 32>}, {pipeline_mode = #tpu.pipeline_mode<synchronous>, transform_indices = @transform_8, window_bounds = array<i64: 1, 32>}, {transform_indices = @transform_9, window_bounds = array<i64: 1, 8, 32>}]} {
    %c0 = arith.constant 0 : index
    %c0_0 = arith.constant 0 : index
    %c0_1 = arith.constant 0 : index
    %0 = vector.load %arg2[%c0, %c0_0, %c0_1] : memref<1x8x32xf32, #tpu.memory_space<vmem>>, vector<1x8x32xf32>
    %1 = vector.shape_cast %0 : vector<1x8x32xf32> to vector<8x32xf32>
    %c0_2 = arith.constant 0 : index
    %c0_3 = arith.constant 0 : index
    %c0_4 = arith.constant 0 : index
    %c0_5 = arith.constant 0 : index
    %2 = vector.load %arg4[%c0_2, %c0_3, %c0_4, %c0_5] : memref<1x4x8x8xbf16, #tpu.memory_space<vmem>>, vector<1x4x8x8xbf16>
    %3 = vector.shape_cast %2 : vector<1x4x8x8xbf16> to vector<4x8x8xbf16>
    %c0_6 = arith.constant 0 : index
    %c0_7 = arith.constant 0 : index
    %c0_8 = arith.constant 0 : index
    %c0_9 = arith.constant 0 : index
    %4 = vector.load %arg5[%c0_6, %c0_7, %c0_8, %c0_9] : memref<1x4x8x8xbf16, #tpu.memory_space<vmem>>, vector<1x4x8x8xbf16>
    %5 = vector.shape_cast %4 : vector<1x4x8x8xbf16> to vector<4x8x8xbf16>
    %c0_10 = arith.constant 0 : index
    %c0_11 = arith.constant 0 : index
    %c0_12 = arith.constant 0 : index
    %c0_13 = arith.constant 0 : index
    %6 = vector.load %arg6[%c0_10, %c0_11, %c0_12, %c0_13] : memref<1x4x8x8xbf16, #tpu.memory_space<vmem>>, vector<1x4x8x8xbf16>
    %7 = vector.shape_cast %6 : vector<1x4x8x8xbf16> to vector<4x8x8xbf16>
    %c0_14 = arith.constant 0 : index
    %c0_15 = arith.constant 0 : index
    %c0_16 = arith.constant 0 : index
    %c0_17 = arith.constant 0 : index
    %8 = vector.load %arg3[%c0_14, %c0_15, %c0_16, %c0_17] : memref<1x1x1x8xf32, #tpu.memory_space<vmem>>, vector<1x1x1x8xf32>
    %9 = vector.shape_cast %8 : vector<1x1x1x8xf32> to vector<1x8xf32>
    "tpu.trace_start"() <{level = 10 : i32, message = "nqd,nkd->nqk"}> : () -> ()
    %cst = arith.constant dense<0.000000e+00> : vector<4x8x8xf32>
    %10 = tpu.matmul %3, %5, %cst {dimension_numbers = #tpu.dot_dimension_numbers<[2], [2], [1], [1], [0, 0, 0, 1, 1, 1], [0], [0]>} : vector<4x8x8xbf16>, vector<4x8x8xbf16>, vector<4x8x8xf32> -> vector<4x8x8xf32>
    "tpu.trace_stop"() : () -> ()
    %11 = vector.shape_cast %9 : vector<1x8xf32> to vector<1x1x8xf32>
    %12 = vector.broadcast %11 : vector<1x1x8xf32> to vector<4x8x8xf32>
    %13 = arith.addf %10, %12 : vector<4x8x8xf32>
    %cst_18 = arith.constant dense<0xFF800000> : vector<4x8xf32>
    %14 = vector.multi_reduction <maximumf>, %13, %cst_18 [2] : vector<4x8x8xf32> to vector<4x8xf32>
    %15 = vector.shape_cast %14 : vector<4x8xf32> to vector<4x8x1xf32>
    %16 = vector.broadcast %15 : vector<4x8x1xf32> to vector<4x8x8xf32>
    %17 = arith.subf %13, %16 : vector<4x8x8xf32>
    %18 = math.exp %17 : vector<4x8x8xf32>
    %cst_19 = arith.constant dense<0.000000e+00> : vector<4x8xf32>
    %19 = vector.multi_reduction <add>, %18, %cst_19 [2] : vector<4x8x8xf32> to vector<4x8xf32>
    %20 = vector.shape_cast %19 : vector<4x8xf32> to vector<4x8x1xf32>
    %21 = tpu.reciprocal %20 {approx = true} : vector<4x8x1xf32> -> vector<4x8x1xf32>
    %22 = vector.broadcast %21 : vector<4x8x1xf32> to vector<4x8x8xf32>
    %23 = arith.mulf %18, %22 : vector<4x8x8xf32>
    %24 = arith.truncf %23 : vector<4x8x8xf32> to vector<4x8x8xbf16>
    "tpu.trace_start"() <{level = 10 : i32, message = "nqk,nkd->nqd"}> : () -> ()
    %cst_20 = arith.constant dense<0.000000e+00> : vector<4x8x8xf32>
    %25 = tpu.matmul %24, %7, %cst_20 {dimension_numbers = #tpu.dot_dimension_numbers<[2], [1], [1], [2], [0, 0, 0, 1, 1, 2], [0], [0]>} : vector<4x8x8xbf16>, vector<4x8x8xbf16>, vector<4x8x8xf32> -> vector<4x8x8xf32>
    "tpu.trace_stop"() : () -> ()
    %26 = arith.truncf %25 : vector<4x8x8xf32> to vector<4x8x8xbf16>
    %27 = vector.extract_strided_slice %26 {offsets = [0, 0, 0], sizes = [1, 8, 8], strides = [1, 1, 1]} : vector<4x8x8xbf16> to vector<1x8x8xbf16>
    %28 = vector.shape_cast %27 : vector<1x8x8xbf16> to vector<8x8xbf16>
    %c0_21 = arith.constant 0 : index
    %c0_22 = arith.constant 0 : index
    %c0_23 = arith.constant 0 : index
    %29 = vector.load %arg7[%c0_21, %c0_22, %c0_23] : memref<4x8x32xbf16, #tpu.memory_space<vmem>>, vector<1x8x32xbf16>
    %30 = vector.shape_cast %29 : vector<1x8x32xbf16> to vector<8x32xbf16>
    %cst_24 = arith.constant dense<0.000000e+00> : vector<8x32xf32>
    %31 = tpu.matmul %28, %30, %cst_24 {dimension_numbers = #tpu.dot_dimension_numbers<[1], [0], [0], [1], [0, 0, 1, 1], [], []>} : vector<8x8xbf16>, vector<8x32xbf16>, vector<8x32xf32> -> vector<8x32xf32>
    %32 = vector.extract_strided_slice %26 {offsets = [1, 0, 0], sizes = [1, 8, 8], strides = [1, 1, 1]} : vector<4x8x8xbf16> to vector<1x8x8xbf16>
    %33 = vector.shape_cast %32 : vector<1x8x8xbf16> to vector<8x8xbf16>
    %c1 = arith.constant 1 : index
    %c0_25 = arith.constant 0 : index
    %c0_26 = arith.constant 0 : index
    %34 = vector.load %arg7[%c1, %c0_25, %c0_26] : memref<4x8x32xbf16, #tpu.memory_space<vmem>>, vector<1x8x32xbf16>
    %35 = vector.shape_cast %34 : vector<1x8x32xbf16> to vector<8x32xbf16>
    %cst_27 = arith.constant dense<0.000000e+00> : vector<8x32xf32>
    %36 = tpu.matmul %33, %35, %cst_27 {dimension_numbers = #tpu.dot_dimension_numbers<[1], [0], [0], [1], [0, 0, 1, 1], [], []>} : vector<8x8xbf16>, vector<8x32xbf16>, vector<8x32xf32> -> vector<8x32xf32>
    %37 = arith.addf %31, %36 : vector<8x32xf32>
    %38 = vector.extract_strided_slice %26 {offsets = [2, 0, 0], sizes = [1, 8, 8], strides = [1, 1, 1]} : vector<4x8x8xbf16> to vector<1x8x8xbf16>
    %39 = vector.shape_cast %38 : vector<1x8x8xbf16> to vector<8x8xbf16>
    %c2 = arith.constant 2 : index
    %c0_28 = arith.constant 0 : index
    %c0_29 = arith.constant 0 : index
    %40 = vector.load %arg7[%c2, %c0_28, %c0_29] : memref<4x8x32xbf16, #tpu.memory_space<vmem>>, vector<1x8x32xbf16>
    %41 = vector.shape_cast %40 : vector<1x8x32xbf16> to vector<8x32xbf16>
    %cst_30 = arith.constant dense<0.000000e+00> : vector<8x32xf32>
    %42 = tpu.matmul %39, %41, %cst_30 {dimension_numbers = #tpu.dot_dimension_numbers<[1], [0], [0], [1], [0, 0, 1, 1], [], []>} : vector<8x8xbf16>, vector<8x32xbf16>, vector<8x32xf32> -> vector<8x32xf32>
    %43 = arith.addf %37, %42 : vector<8x32xf32>
    %44 = vector.extract_strided_slice %26 {offsets = [3, 0, 0], sizes = [1, 8, 8], strides = [1, 1, 1]} : vector<4x8x8xbf16> to vector<1x8x8xbf16>
    %45 = vector.shape_cast %44 : vector<1x8x8xbf16> to vector<8x8xbf16>
    %c3 = arith.constant 3 : index
    %c0_31 = arith.constant 0 : index
    %c0_32 = arith.constant 0 : index
    %46 = vector.load %arg7[%c3, %c0_31, %c0_32] : memref<4x8x32xbf16, #tpu.memory_space<vmem>>, vector<1x8x32xbf16>
    %47 = vector.shape_cast %46 : vector<1x8x32xbf16> to vector<8x32xbf16>
    %cst_33 = arith.constant dense<0.000000e+00> : vector<8x32xf32>
    %48 = tpu.matmul %45, %47, %cst_33 {dimension_numbers = #tpu.dot_dimension_numbers<[1], [0], [0], [1], [0, 0, 1, 1], [], []>} : vector<8x8xbf16>, vector<8x32xbf16>, vector<8x32xf32> -> vector<8x32xf32>
    %49 = arith.addf %43, %48 : vector<8x32xf32>
    %c0_34 = arith.constant 0 : index
    %c0_35 = arith.constant 0 : index
    %50 = vector.load %arg8[%c0_34, %c0_35] : memref<1x32xf32, #tpu.memory_space<vmem>>, vector<1x32xf32>
    %51 = vector.broadcast %50 : vector<1x32xf32> to vector<8x32xf32>
    %52 = arith.addf %49, %51 : vector<8x32xf32>
    %53 = arith.addf %52, %1 : vector<8x32xf32>
    %cst_36 = arith.constant dense<0.000000e+00> : vector<8xf32>
    %54 = vector.multi_reduction <add>, %53, %cst_36 [1] : vector<8x32xf32> to vector<8xf32>
    %55 = vector.shape_cast %54 : vector<8xf32> to vector<8x1xf32>
    %cst_37 = arith.constant 3.200000e+01 : f32
    %56 = vector.broadcast %cst_37 : f32 to vector<8x1xf32>
    %57 = arith.divf %55, %56 : vector<8x1xf32>
    %58 = vector.broadcast %57 : vector<8x1xf32> to vector<8x32xf32>
    %59 = arith.subf %53, %58 : vector<8x32xf32>
    %60 = arith.mulf %59, %59 : vector<8x32xf32>
    %cst_38 = arith.constant dense<0.000000e+00> : vector<8xf32>
    %61 = vector.multi_reduction <add>, %60, %cst_38 [1] : vector<8x32xf32> to vector<8xf32>
    %62 = vector.shape_cast %61 : vector<8xf32> to vector<8x1xf32>
    %cst_39 = arith.constant 3.200000e+01 : f32
    %63 = vector.broadcast %cst_39 : f32 to vector<8x1xf32>
    %64 = arith.divf %62, %63 : vector<8x1xf32>
    %cst_40 = arith.constant 9.99999996E-13 : f32
    %65 = vector.broadcast %cst_40 : f32 to vector<8x1xf32>
    %66 = arith.addf %64, %65 : vector<8x1xf32>
    %67 = math.rsqrt %66 : vector<8x1xf32>
    %68 = vector.broadcast %67 : vector<8x1xf32> to vector<8x32xf32>
    %69 = arith.mulf %59, %68 : vector<8x32xf32>
    %c0_41 = arith.constant 0 : index
    %c0_42 = arith.constant 0 : index
    %70 = vector.load %arg9[%c0_41, %c0_42] : memref<1x32xf32, #tpu.memory_space<vmem>>, vector<1x32xf32>
    %71 = vector.broadcast %70 : vector<1x32xf32> to vector<8x32xf32>
    %72 = arith.mulf %69, %71 : vector<8x32xf32>
    %c0_43 = arith.constant 0 : index
    %c0_44 = arith.constant 0 : index
    %73 = vector.load %arg10[%c0_43, %c0_44] : memref<1x32xf32, #tpu.memory_space<vmem>>, vector<1x32xf32>
    %74 = vector.broadcast %73 : vector<1x32xf32> to vector<8x32xf32>
    %75 = arith.addf %72, %74 : vector<8x32xf32>
    %c0_45 = arith.constant 0 : index
    %c0_46 = arith.constant 0 : index
    %c0_47 = arith.constant 0 : index
    %76 = vector.load %arg11[%c0_45, %c0_46, %c0_47] : memref<1x8x32xf32, #tpu.memory_space<vmem>>, vector<1x8x32xf32>
    %77 = vector.shape_cast %76 : vector<1x8x32xf32> to vector<8x32xf32>
    %78 = vector.shape_cast %75 : vector<8x32xf32> to vector<1x8x32xf32>
    tpu.vector_store %arg11[%c0_45, %c0_46, %c0_47], %78 {strides = array<i32>} : memref<1x8x32xf32, #tpu.memory_space<vmem>>, vector<1x8x32xf32>,
    return
  }
  func.func @transform_0(%arg0: i32, %arg1: i32) -> (i32, i32, i32) {
    %c0_i32 = arith.constant 0 : i32
    %c0_i32_0 = arith.constant 0 : i32
    return %arg0, %arg1, %c0_i32 : i32, i32, i32
  }
  func.func @transform_1(%arg0: i32, %arg1: i32) -> (i32, i32, i32, i32) {
    %c0_i32 = arith.constant 0 : i32
    %c0_i32_0 = arith.constant 0 : i32
    %c0_i32_1 = arith.constant 0 : i32
    %c0_i32_2 = arith.constant 0 : i32
    return %arg0, %c0_i32, %c0_i32_0, %c0_i32_1 : i32, i32, i32, i32
  }
  func.func @transform_2(%arg0: i32, %arg1: i32) -> (i32, i32, i32, i32) {
    %c0_i32 = arith.constant 0 : i32
    %c0_i32_0 = arith.constant 0 : i32
    %c0_i32_1 = arith.constant 0 : i32
    return %arg0, %c0_i32, %arg1, %c0_i32_0 : i32, i32, i32, i32
  }
  func.func @transform_3(%arg0: i32, %arg1: i32) -> (i32, i32, i32, i32) {
    %c0_i32 = arith.constant 0 : i32
    %c0_i32_0 = arith.constant 0 : i32
    %c0_i32_1 = arith.constant 0 : i32
    %c0_i32_2 = arith.constant 0 : i32
    return %arg0, %c0_i32, %c0_i32_0, %c0_i32_1 : i32, i32, i32, i32
  }
  func.func @transform_4(%arg0: i32, %arg1: i32) -> (i32, i32, i32, i32) {
    %c0_i32 = arith.constant 0 : i32
    %c0_i32_0 = arith.constant 0 : i32
    %c0_i32_1 = arith.constant 0 : i32
    %c0_i32_2 = arith.constant 0 : i32
    return %arg0, %c0_i32, %c0_i32_0, %c0_i32_1 : i32, i32, i32, i32
  }
  func.func @transform_5(%arg0: i32, %arg1: i32) -> (i32, i32, i32) {
    %c0_i32 = arith.constant 0 : i32
    %c0_i32_0 = arith.constant 0 : i32
    %c0_i32_1 = arith.constant 0 : i32
    %c0_i32_2 = arith.constant 0 : i32
    return %c0_i32, %c0_i32_0, %c0_i32_1 : i32, i32, i32
  }
  func.func @transform_6(%arg0: i32, %arg1: i32) -> (i32, i32) {
    %c0_i32 = arith.constant 0 : i32
    %c0_i32_0 = arith.constant 0 : i32
    %c0_i32_1 = arith.constant 0 : i32
    return %c0_i32, %c0_i32_0 : i32, i32
  }
  func.func @transform_7(%arg0: i32, %arg1: i32) -> (i32, i32) {
    %c0_i32 = arith.constant 0 : i32
    %c0_i32_0 = arith.constant 0 : i32
    %c0_i32_1 = arith.constant 0 : i32
    return %c0_i32, %c0_i32_0 : i32, i32
  }
  func.func @transform_8(%arg0: i32, %arg1: i32) -> (i32, i32) {
    %c0_i32 = arith.constant 0 : i32
    %c0_i32_0 = arith.constant 0 : i32
    %c0_i32_1 = arith.constant 0 : i32
    return %c0_i32, %c0_i32_0 : i32, i32
  }
  func.func @transform_9(%arg0: i32, %arg1: i32) -> (i32, i32, i32) {
    %c0_i32 = arith.constant 0 : i32
    %c0_i32_0 = arith.constant 0 : i32
    return %arg0, %arg1, %c0_i32 : i32, i32, i32
  }
}

module attributes {stable_mosaic.version = 11 : i64} {
  func.func @bert_attention_kernel(%arg0: i32, %arg1: i32, %arg2: memref<1x8x32xf32, #tpu.memory_space<vmem>>, %arg3: memref<1x1x1x8xf32, #tpu.memory_space<vmem>>, %arg4: memref<1x4x8x8xbf16, #tpu.memory_space<vmem>>, %arg5: memref<1x4x8x8xbf16, #tpu.memory_space<vmem>>, %arg6: memref<1x4x8x8xbf16, #tpu.memory_space<vmem>>, %arg7: memref<4x8x32xbf16, #tpu.memory_space<vmem>>, %arg8: memref<1x32xf32, #tpu.memory_space<vmem>>, %arg9: memref<1x32xf32, #tpu.memory_space<vmem>>, %arg10: memref<1x32xf32, #tpu.memory_space<vmem>>, %arg11: memref<1x8x32xf32, #tpu.memory_space<vmem>>) attributes {dimension_semantics = [#tpu.dimension_semantics<parallel>, #tpu.dimension_semantics<parallel>], iteration_bounds = array<i64: 2, 1>, scalar_prefetch = 0 : i64, scratch_operands = 0 : i64, tpu.core_type = #tpu.core_type<tc>, window_params = [{transform_indices = @transform_0, window_bounds = array<i64: 1, 8, 32>}, {transform_indices = @transform_1, window_bounds = array<i64: 1, 1, 1, 8>}, {transform_indices = @transform_2, window_bounds = array<i64: 1, 4, 8, 8>}, {transform_indices = @transform_3, window_bounds = array<i64: 1, 4, 8, 8>}, {transform_indices = @transform_4, window_bounds = array<i64: 1, 4, 8, 8>}, {pipeline_mode = #tpu.pipeline_mode<synchronous>, transform_indices = @transform_5, window_bounds = array<i64: 4, 8, 32>}, {pipeline_mode = #tpu.pipeline_mode<synchronous>, transform_indices = @transform_6, window_bounds = array<i64: 1, 32>}, {pipeline_mode = #tpu.pipeline_mode<synchronous>, transform_indices = @transform_7, window_bounds = array<i64: 1, 32>}, {pipeline_mode = #tpu.pipeline_mode<synchronous>, transform_indices = @transform_8, window_bounds = array<i64: 1, 32>}, {transform_indices = @transform_9, window_bounds = array<i64: 1, 8, 32>}]} {
    %c0 = arith.constant 0 : index
    %c0_0 = arith.constant 0 : index
    %c0_1 = arith.constant 0 : index
    %0 = vector.load %arg2[%c0, %c0_0, %c0_1] : memref<1x8x32xf32, #tpu.memory_space<vmem>>, vector<1x8x32xf32>
    %1 = vector.shape_cast %0 : vector<1x8x32xf32> to vector<8x32xf32>
    %c0_2 = arith.constant 0 : index
    %c0_3 = arith.constant 0 : index
    %c0_4 = arith.constant 0 : index
    %c0_5 = arith.constant 0 : index
    %2 = vector.load %arg4[%c0_2, %c0_3, %c0_4, %c0_5] : memref<1x4x8x8xbf16, #tpu.memory_space<vmem>>, vector<1x4x8x8xbf16>
    %3 = vector.shape_cast %2 : vector<1x4x8x8xbf16> to vector<4x8x8xbf16>
    %c0_6 = arith.constant 0 : index
    %c0_7 = arith.constant 0 : index
    %c0_8 = arith.constant 0 : index
    %c0_9 = arith.constant 0 : index
    %4 = vector.load %arg5[%c0_6, %c0_7, %c0_8, %c0_9] : memref<1x4x8x8xbf16, #tpu.memory_space<vmem>>, vector<1x4x8x8xbf16>
    %5 = vector.shape_cast %4 : vector<1x4x8x8xbf16> to vector<4x8x8xbf16>
    %c0_10 = arith.constant 0 : index
    %c0_11 = arith.constant 0 : index
    %c0_12 = arith.constant 0 : index
    %c0_13 = arith.constant 0 : index
    %6 = vector.load %arg6[%c0_10, %c0_11, %c0_12, %c0_13] : memref<1x4x8x8xbf16, #tpu.memory_space<vmem>>, vector<1x4x8x8xbf16>
    %7 = vector.shape_cast %6 : vector<1x4x8x8xbf16> to vector<4x8x8xbf16>
    %c0_14 = arith.constant 0 : index
    %c0_15 = arith.constant 0 : index
    %c0_16 = arith.constant 0 : index
    %c0_17 = arith.constant 0 : index
    %8 = vector.load %arg3[%c0_14, %c0_15, %c0_16, %c0_17] : memref<1x1x1x8xf32, #tpu.memory_space<vmem>>, vector<1x1x1x8xf32>
    %9 = vector.shape_cast %8 : vector<1x1x1x8xf32> to vector<1x8xf32>
    "tpu.trace_start"() <{level = 10 : i32, message = "nqd,nkd->nqk"}> : () -> ()
    %cst = arith.constant dense<0.000000e+00> : vector<4x8x8xf32>
    %10 = tpu.matmul %3, %5, %cst {dimension_numbers = #tpu.dot_dimension_numbers<[2], [2], [1], [1], [0, 0, 0, 1, 1, 1], [0], [0]>} : vector<4x8x8xbf16>, vector<4x8x8xbf16>, vector<4x8x8xf32> -> vector<4x8x8xf32>
    "tpu.trace_stop"() : () -> ()
    %11 = vector.shape_cast %9 : vector<1x8xf32> to vector<1x1x8xf32>
    %12 = vector.broadcast %11 : vector<1x1x8xf32> to vector<4x8x8xf32>
    %13 = arith.addf %10, %12 : vector<4x8x8xf32>
    %cst_18 = arith.constant dense<0xFF800000> : vector<4x8xf32>
    %14 = vector.multi_reduction <maximumf>, %13, %cst_18 [2] : vector<4x8x8xf32> to vector<4x8xf32>
    %15 = vector.shape_cast %14 : vector<4x8xf32> to vector<4x8x1xf32>
    %16 = vector.broadcast %15 : vector<4x8x1xf32> to vector<4x8x8xf32>
    %17 = arith.subf %13, %16 : vector<4x8x8xf32>
    %18 = math.exp %17 : vector<4x8x8xf32>
    %cst_19 = arith.constant dense<0.000000e+00> : vector<4x8xf32>
    %19 = vector.multi_reduction <add>, %18, %cst_19 [2] : vector<4x8x8xf32> to vector<4x8xf32>
    %20 = vector.shape_cast %19 : vector<4x8xf32> to vector<4x8x1xf32>
    %21 = tpu.reciprocal %20 {approx = true} : vector<4x8x1xf32> -> vector<4x8x1xf32>
    %22 = vector.broadcast %21 : vector<4x8x1xf32> to vector<4x8x8xf32>
    %23 = arith.mulf %18, %22 : vector<4x8x8xf32>
    %24 = arith.truncf %23 : vector<4x8x8xf32> to vector<4x8x8xbf16>
    "tpu.trace_start"() <{level = 10 : i32, message = "nqk,nkd->nqd"}> : () -> ()
    %cst_20 = arith.constant dense<0.000000e+00> : vector<4x8x8xf32>
    %25 = tpu.matmul %24, %7, %cst_20 {dimension_numbers = #tpu.dot_dimension_numbers<[2], [1], [1], [2], [0, 0, 0, 1, 1, 2], [0], [0]>} : vector<4x8x8xbf16>, vector<4x8x8xbf16>, vector<4x8x8xf32> -> vector<4x8x8xf32>
    "tpu.trace_stop"() : () -> ()
    %26 = arith.truncf %25 : vector<4x8x8xf32> to vector<4x8x8xbf16>
    %27 = vector.extract_strided_slice %26 {offsets = [0, 0, 0], sizes = [1, 8, 8], strides = [1, 1, 1]} : vector<4x8x8xbf16> to vector<1x8x8xbf16>
    %28 = vector.shape_cast %27 : vector<1x8x8xbf16> to vector<8x8xbf16>
    %c0_21 = arith.constant 0 : index
    %c0_22 = arith.constant 0 : index
    %c0_23 = arith.constant 0 : index
    %29 = vector.load %arg7[%c0_21, %c0_22, %c0_23] : memref<4x8x32xbf16, #tpu.memory_space<vmem>>, vector<1x8x32xbf16>
    %30 = vector.shape_cast %29 : vector<1x8x32xbf16> to vector<8x32xbf16>
    %cst_24 = arith.constant dense<0.000000e+00> : vector<8x32xf32>
    %31 = tpu.matmul %28, %30, %cst_24 {dimension_numbers = #tpu.dot_dimension_numbers<[1], [0], [0], [1], [0, 0, 1, 1], [], []>} : vector<8x8xbf16>, vector<8x32xbf16>, vector<8x32xf32> -> vector<8x32xf32>
    %32 = vector.extract_strided_slice %26 {offsets = [1, 0, 0], sizes = [1, 8, 8], strides = [1, 1, 1]} : vector<4x8x8xbf16> to vector<1x8x8xbf16>
    %33 = vector.shape_cast %32 : vector<1x8x8xbf16> to vector<8x8xbf16>
    %c1 = arith.constant 1 : index
    %c0_25 = arith.constant 0 : index
    %c0_26 = arith.constant 0 : index
    %34 = vector.load %arg7[%c1, %c0_25, %c0_26] : memref<4x8x32xbf16, #tpu.memory_space<vmem>>, vector<1x8x32xbf16>
    %35 = vector.shape_cast %34 : vector<1x8x32xbf16> to vector<8x32xbf16>
    %cst_27 = arith.constant dense<0.000000e+00> : vector<8x32xf32>
    %36 = tpu.matmul %33, %35, %cst_27 {dimension_numbers = #tpu.dot_dimension_numbers<[1], [0], [0], [1], [0, 0, 1, 1], [], []>} : vector<8x8xbf16>, vector<8x32xbf16>, vector<8x32xf32> -> vector<8x32xf32>
    %37 = arith.addf %31, %36 : vector<8x32xf32>
    %38 = vector.extract_strided_slice %26 {offsets = [2, 0, 0], sizes = [1, 8, 8], strides = [1, 1, 1]} : vector<4x8x8xbf16> to vector<1x8x8xbf16>
    %39 = vector.shape_cast %38 : vector<1x8x8xbf16> to vector<8x8xbf16>
    %c2 = arith.constant 2 : index
    %c0_28 = arith.constant 0 : index
    %c0_29 = arith.constant 0 : index
    %40 = vector.load %arg7[%c2, %c0_28, %c0_29] : memref<4x8x32xbf16, #tpu.memory_space<vmem>>, vector<1x8x32xbf16>
    %41 = vector.shape_cast %40 : vector<1x8x32xbf16> to vector<8x32xbf16>
    %cst_30 = arith.constant dense<0.000000e+00> : vector<8x32xf32>
    %42 = tpu.matmul %39, %41, %cst_30 {dimension_numbers = #tpu.dot_dimension_numbers<[1], [0], [0], [1], [0, 0, 1, 1], [], []>} : vector<8x8xbf16>, vector<8x32xbf16>, vector<8x32xf32> -> vector<8x32xf32>
    %43 = arith.addf %37, %42 : vector<8x32xf32>
    %44 = vector.extract_strided_slice %26 {offsets = [3, 0, 0], sizes = [1, 8, 8], strides = [1, 1, 1]} : vector<4x8x8xbf16> to vector<1x8x8xbf16>
    %45 = vector.shape_cast %44 : vector<1x8x8xbf16> to vector<8x8xbf16>
    %c3 = arith.constant 3 : index
    %c0_31 = arith.constant 0 : index
    %c0_32 = arith.constant 0 : index
    %46 = vector.load %arg7[%c3, %c0_31, %c0_32] : memref<4x8x32xbf16, #tpu.memory_space<vmem>>, vector<1x8x32xbf16>
    %47 = vector.shape_cast %46 : vector<1x8x32xbf16> to vector<8x32xbf16>
    %cst_33 = arith.constant dense<0.000000e+00> : vector<8x32xf32>
    %48 = tpu.matmul %45, %47, %cst_33 {dimension_numbers = #tpu.dot_dimension_numbers<[1], [0], [0], [1], [0, 0, 1, 1], [], []>} : vector<8x8xbf16>, vector<8x32xbf16>, vector<8x32xf32> -> vector<8x32xf32>
    %49 = arith.addf %43, %48 : vector<8x32xf32>
    %c0_34 = arith.constant 0 : index
    %c0_35 = arith.constant 0 : index
    %50 = vector.load %arg8[%c0_34, %c0_35] : memref<1x32xf32, #tpu.memory_space<vmem>>, vector<1x32xf32>
    %51 = vector.broadcast %50 : vector<1x32xf32> to vector<8x32xf32>
    %52 = arith.addf %49, %51 : vector<8x32xf32>
    %53 = arith.addf %52, %1 : vector<8x32xf32>
    %cst_36 = arith.constant dense<0.000000e+00> : vector<8xf32>
    %54 = vector.multi_reduction <add>, %53, %cst_36 [1] : vector<8x32xf32> to vector<8xf32>
    %55 = vector.shape_cast %54 : vector<8xf32> to vector<8x1xf32>
    %cst_37 = arith.constant 3.200000e+01 : f32
    %56 = vector.broadcast %cst_37 : f32 to vector<8x1xf32>
    %57 = arith.divf %55, %56 : vector<8x1xf32>
    %58 = vector.broadcast %57 : vector<8x1xf32> to vector<8x32xf32>
    %59 = arith.subf %53, %58 : vector<8x32xf32>
    %60 = arith.mulf %59, %59 : vector<8x32xf32>
    %cst_38 = arith.constant dense<0.000000e+00> : vector<8xf32>
    %61 = vector.multi_reduction <add>, %60, %cst_38 [1] : vector<8x32xf32> to vector<8xf32>
    %62 = vector.shape_cast %61 : vector<8xf32> to vector<8x1xf32>
    %cst_39 = arith.constant 3.200000e+01 : f32
    %63 = vector.broadcast %cst_39 : f32 to vector<8x1xf32>
    %64 = arith.divf %62, %63 : vector<8x1xf32>
    %cst_40 = arith.constant 9.99999996E-13 : f32
    %65 = vector.broadcast %cst_40 : f32 to vector<8x1xf32>
    %66 = arith.addf %64, %65 : vector<8x1xf32>
    %67 = math.rsqrt %66 : vector<8x1xf32>
    %68 = vector.broadcast %67 : vector<8x1xf32> to vector<8x32xf32>
    %69 = arith.mulf %59, %68 : vector<8x32xf32>
    %c0_41 = arith.constant 0 : index
    %c0_42 = arith.constant 0 : index
    %70 = vector.load %arg9[%c0_41, %c0_42] : memref<1x32xf32, #tpu.memory_space<vmem>>, vector<1x32xf32>
    %71 = vector.broadcast %70 : vector<1x32xf32> to vector<8x32xf32>
    %72 = arith.mulf %69, %71 : vector<8x32xf32>
    %c0_43 = arith.constant 0 : index
    %c0_44 = arith.constant 0 : index
    %73 = vector.load %arg10[%c0_43, %c0_44] : memref<1x32xf32, #tpu.memory_space<vmem>>, vector<1x32xf32>
    %74 = vector.broadcast %73 : vector<1x32xf32> to vector<8x32xf32>
    %75 = arith.addf %72, %74 : vector<8x32xf32>
    %c0_45 = arith.constant 0 : index
    %c0_46 = arith.constant 0 : index
    %c0_47 = arith.constant 0 : index
    %76 = vector.load %arg11[%c0_45, %c0_46, %c0_47] : memref<1x8x32xf32, #tpu.memory_space<vmem>>, vector<1x8x32xf32>
    %77 = vector.shape_cast %76 : vector<1x8x32xf32> to vector<8x32xf32>
    %78 = vector.shape_cast %75 : vector<8x32xf32> to vector<1x8x32xf32>
    tpu.vector_store %arg11[%c0_45, %c0_46, %c0_47], %78 {strides = array<i32>} : memref<1x8x32xf32, #tpu.memory_space<vmem>>, vector<1x8x32xf32>,
    return
  }
  func.func @transform_0(%arg0: i32, %arg1: i32) -> (i32, i32, i32) {
    %c0_i32 = arith.constant 0 : i32
    %c0_i32_0 = arith.constant 0 : i32
    return %arg0, %arg1, %c0_i32 : i32, i32, i32
  }
  func.func @transform_1(%arg0: i32, %arg1: i32) -> (i32, i32, i32, i32) {
    %c0_i32 = arith.constant 0 : i32
    %c0_i32_0 = arith.constant 0 : i32
    %c0_i32_1 = arith.constant 0 : i32
    %c0_i32_2 = arith.constant 0 : i32
    return %arg0, %c0_i32, %c0_i32_0, %c0_i32_1 : i32, i32, i32, i32
  }
  func.func @transform_2(%arg0: i32, %arg1: i32) -> (i32, i32, i32, i32) {
    %c0_i32 = arith.constant 0 : i32
    %c0_i32_0 = arith.constant 0 : i32
    %c0_i32_1 = arith.constant 0 : i32
    return %arg0, %c0_i32, %arg1, %c0_i32_0 : i32, i32, i32, i32
  }
  func.func @transform_3(%arg0: i32, %arg1: i32) -> (i32, i32, i32, i32) {
    %c0_i32 = arith.constant 0 : i32
    %c0_i32_0 = arith.constant 0 : i32
    %c0_i32_1 = arith.constant 0 : i32
    %c0_i32_2 = arith.constant 0 : i32
    return %arg0, %c0_i32, %c0_i32_0, %c0_i32_1 : i32, i32, i32, i32
  }
  func.func @transform_4(%arg0: i32, %arg1: i32) -> (i32, i32, i32, i32) {
    %c0_i32 = arith.constant 0 : i32
    %c0_i32_0 = arith.constant 0 : i32
    %c0_i32_1 = arith.constant 0 : i32
    %c0_i32_2 = arith.constant 0 : i32
    return %arg0, %c0_i32, %c0_i32_0, %c0_i32_1 : i32, i32, i32, i32
  }
  func.func @transform_5(%arg0: i32, %arg1: i32) -> (i32, i32, i32) {
    %c0_i32 = arith.constant 0 : i32
    %c0_i32_0 = arith.constant 0 : i32
    %c0_i32_1 = arith.constant 0 : i32
    %c0_i32_2 = arith.constant 0 : i32
    return %c0_i32, %c0_i32_0, %c0_i32_1 : i32, i32, i32
  }
  func.func @transform_6(%arg0: i32, %arg1: i32) -> (i32, i32) {
    %c0_i32 = arith.constant 0 : i32
    %c0_i32_0 = arith.constant 0 : i32
    %c0_i32_1 = arith.constant 0 : i32
    return %c0_i32, %c0_i32_0 : i32, i32
  }
  func.func @transform_7(%arg0: i32, %arg1: i32) -> (i32, i32) {
    %c0_i32 = arith.constant 0 : i32
    %c0_i32_0 = arith.constant 0 : i32
    %c0_i32_1 = arith.constant 0 : i32
    return %c0_i32, %c0_i32_0 : i32, i32
  }
  func.func @transform_8(%arg0: i32, %arg1: i32) -> (i32, i32) {
    %c0_i32 = arith.constant 0 : i32
    %c0_i32_0 = arith.constant 0 : i32
    %c0_i32_1 = arith.constant 0 : i32
    return %c0_i32, %c0_i32_0 : i32, i32
  }
  func.func @transform_9(%arg0: i32, %arg1: i32) -> (i32, i32, i32) {
    %c0_i32 = arith.constant 0 : i32
    %c0_i32_0 = arith.constant 0 : i32
    return %arg0, %arg1, %c0_i32 : i32, i32, i32
  }
}

</mosaic_0001>

<llo_original>
// kernel: tpu_custom_call.1
$region0: #{tpu_custom_call.1}
  #allocation0 [shape = 'u32[]', space=smem, size = 0x4, offset = 0x4, fixed_abs, tag = 'smem constant byte address 0x4 - core index']
  #allocation1 [shape = 'u32[144,128]{1,0:T(1,128)}', space=vmem, size = 0x12000, scoped, tag = 'internal scratch']
  %s0 = inlined_call_operand.hbm [shape: f32[2,8,32], index: 0, kind: input, shape index: {}]
  %s1 = inlined_call_operand.vmem [shape: f32[2,1,1,8], index: 1, kind: input, shape index: {}]
  %s2 = inlined_call_operand.hbm [shape: bf16[2,4,8,8], index: 2, kind: input, shape index: {}]
  %s3 = inlined_call_operand.hbm [shape: bf16[2,4,8,8], index: 3, kind: input, shape index: {}]
  %s4 = inlined_call_operand.hbm [shape: bf16[2,4,8,8], index: 4, kind: input, shape index: {}]
  %s5 = inlined_call_operand.vmem [shape: bf16[4,8,32], index: 5, kind: input, shape index: {}]
  %s6 = inlined_call_operand.vmem [shape: f32[1,32], index: 6, kind: input, shape index: {}]
  %s7 = inlined_call_operand.vmem [shape: f32[1,32], index: 7, kind: input, shape index: {}]
  %s8 = inlined_call_operand.vmem [shape: f32[1,32], index: 8, kind: input, shape index: {}]
  %s9 = inlined_call_operand.hbm [shape: f32[2,8,32], index: 9, kind: output, shape index: {}]
  %s10 = sld [smem:[#allocation0]]
  $region85: #{tpu_custom_call.1} parent=0
    _
  %s12 = ssub.s32 1, %s10
  %s13 = scalar_select 0, %s12, %s10
  $region1: #{tpu_custom_call.1} parent=0
    #allocation2 [shape = 'u8[8192]{0}', space=vmem, size = 0x2000, scoped, tag = 'input window, operand 0']
    #allocation3 [shape = 's32[2]{0}', space=sflag, size = 0x8, scoped, tag = 'scoped memory for tpu_custom_call.1']
    #allocation4 [shape = 's32[2]{0}', space=sflag, size = 0x8, scoped, tag = 'scoped memory for tpu_custom_call.1']
    #allocation5 [shape = 'u8[16384]{0}', space=vmem, size = 0x4000, scoped, tag = 'input window, operand 2']
    #allocation6 [shape = 's32[2]{0}', space=sflag, size = 0x8, scoped, tag = 'scoped memory for tpu_custom_call.1']
    #allocation7 [shape = 'u8[16384]{0}', space=vmem, size = 0x4000, scoped, tag = 'input window, operand 3']
    #allocation8 [shape = 'u8[16384]{0}', space=vmem, size = 0x4000, scoped, tag = 'input window, operand 4']
    #allocation9 [shape = 's32[2]{0}', space=sflag, size = 0x8, scoped, tag = 'scoped memory for tpu_custom_call.1']
    #allocation10 [shape = 'u8[8192]{0}', space=vmem, size = 0x2000, scoped, tag = 'output window, operand 0']
    %14 = vsyncpa [#allocation3], 0
    %s15 = scalar_lea.sflag [#allocation3], 1
    %16 = vsyncpa %s15, 0
    %17 = vsyncpa [#allocation6], 0
    %s18 = scalar_lea.sflag [#allocation6], 1
    %19 = vsyncpa %s18, 0
    %20 = vsyncpa [#allocation9], 0
    %s21 = scalar_lea.sflag [#allocation9], 1
    %22 = vsyncpa %s21, 0
    %23 = vsyncpa [#allocation4], 0
    %s24 = scalar_lea.sflag [#allocation4], 1
    %25 = vsyncpa %s24, 0
    loop: start=0, step=1, limit=4
    $region2: #{tpu_custom_call.1} parent=1 // loop_pre_header
      _
    $region3: #{tpu_custom_call.1} parent=1 // loop_header
      %s27 = sphi 0, %s31
      %p28 = scmp.ge.s32.totalorder %s27, 4
      %s34 = sphi 0, %s46
      %s35 = sphi 0, %s42
      %s36 = sphi 0, %s34
      %s37 = sphi 0, %s35
      %s38 = sphi 0, %s36
      %s39 = sphi 0, %s37
      %s51 = sphi 0, %s53
      %s54 = sphi 0, %s51
      %s55 = sphi 0, %s54
      %s71 = sphi 0, %s55
      %s77 = sphi 0, %s79
      %s80 = sphi 0, %s77
      %s81 = sphi 0, %s80
      %s97 = sphi 0, %s81
      %s105 = sphi 0, %s107
      %s108 = sphi 0, %s105
      %s109 = sphi 0, %s108
      %s125 = sphi 0, %s109
      %s131 = sphi 0, %s133
      %s134 = sphi 0, %s131
      %s135 = sphi 0, %s134
      %s151 = sphi 0, %s135
      %s157 = sphi 0, %s159
      %s160 = sphi 0, %s157
      %s161 = sphi 0, %s160
      %s177 = sphi 0, %s161
      %s181 = sphi 0, %s181
      %s183 = sphi 0, %s181
      %s184 = sphi 0, %s183
      %s198 = sphi 0, %s184
      %s202 = sphi 0, %s202
      %s204 = sphi 0, %s202
      %s205 = sphi 0, %s204
      %s219 = sphi 0, %s205
      %s223 = sphi 0, %s223
      %s225 = sphi 0, %s223
      %s226 = sphi 0, %s225
      %s240 = sphi 0, %s226
      %s244 = sphi 0, %s244
      %s246 = sphi 0, %s244
      %s247 = sphi 0, %s246
      %s261 = sphi 0, %s247
      %s269 = sphi 0, %s271
      %s272 = sphi 0, %s269
      %s273 = sphi 0, %s272
      %s289 = sphi 0, %s273
    $region4: #{tpu_custom_call.1} parent=1 // loop_header_branch
      %30 = sbr.rel (%p28) target = $region8
    $region5: #{tpu_custom_call.1} parent=1 // loop_body
      %s32 = ssub.s32 %s27, 1
      %s33 = ssub.s32 %s27, 2
      %s40 = sadd.s32 1, %s35
      %p41 = scmp.ge.s32.totalorder %s40, 1
      %s42 = scalar_select %p41, 0, %s40
      %s43 = sadd.s32 1, %s34
      %s44 = scalar_select %p41, %s43, %s34
      %p45 = scmp.ge.s32.totalorder %s44, 2
      %s46 = scalar_select %p45, 0, %s44
      %s47 = ssub.s32 %s34, %s46
      %s48 = ssub.s32 %s35, %s42
      %s49 = sor.u32 %s47, %s48
      %p50 = scmp.eq.s32.totalorder %s49, 0
      %s52 = sadd.s32 %s51, 1
      %s53 = scalar_select %p50, %s51, %s52
      %p56 = pneg %p50
      %p57 = scmp.eq.s32.totalorder %s27, 1
      %p58 = por %p56, %p57
      %p59 = scmp.ne.s32.totalorder %s51, %s54
      %p60 = scmp.eq.s32.totalorder %s27, 0
      %p61 = por %p59, %p60
      %p62 = scmp.ne.s32.totalorder %s51, %s54
      %p63 = scmp.eq.s32.totalorder %s32, 1
      %p64 = por %p62, %p63
      %p65 = scmp.ne.s32.totalorder %s54, %s55
      %p66 = scmp.eq.s32.totalorder %s32, 0
      %p67 = por %p65, %p66
      %p68 = scmp.ne.s32.totalorder %s54, %s55
      %p69 = scmp.eq.s32.totalorder %s33, 1
      %p70 = por %p68, %p69
      %p72 = scmp.ne.s32.totalorder %s55, %s71
      %p73 = scmp.eq.s32.totalorder %s33, 0
      %p74 = por %p72, %p73
      %s75 = ssub.s32 %s34, %s46
      %p76 = scmp.eq.s32.totalorder %s75, 0
      %s78 = sadd.s32 %s77, 1
      %s79 = scalar_select %p76, %s77, %s78
      %p82 = pneg %p76
      %p83 = scmp.eq.s32.totalorder %s27, 1
      %p84 = por %p82, %p83
      %p85 = scmp.ne.s32.totalorder %s77, %s80
      %p86 = scmp.eq.s32.totalorder %s27, 0
      %p87 = por %p85, %p86
      %p88 = scmp.ne.s32.totalorder %s77, %s80
      %p89 = scmp.eq.s32.totalorder %s32, 1
      %p90 = por %p88, %p89
      %p91 = scmp.ne.s32.totalorder %s80, %s81
      %p92 = scmp.eq.s32.totalorder %s32, 0
      %p93 = por %p91, %p92
      %p94 = scmp.ne.s32.totalorder %s80, %s81
      %p95 = scmp.eq.s32.totalorder %s33, 1
      %p96 = por %p94, %p95
      %p98 = scmp.ne.s32.totalorder %s81, %s97
      %p99 = scmp.eq.s32.totalorder %s33, 0
      %p100 = por %p98, %p99
      %s101 = ssub.s32 %s34, %s46
      %s102 = ssub.s32 %s35, %s42
      %s103 = sor.u32 %s101, %s102
      %p104 = scmp.eq.s32.totalorder %s103, 0
      %s106 = sadd.s32 %s105, 1
      %s107 = scalar_select %p104, %s105, %s106
      %p110 = pneg %p104
      %p111 = scmp.eq.s32.totalorder %s27, 1
      %p112 = por %p110, %p111
      %p113 = scmp.ne.s32.totalorder %s105, %s108
      %p114 = scmp.eq.s32.totalorder %s27, 0
      %p115 = por %p113, %p114
      %p116 = scmp.ne.s32.totalorder %s105, %s108
      %p117 = scmp.eq.s32.totalorder %s32, 1
      %p118 = por %p116, %p117
      %p119 = scmp.ne.s32.totalorder %s108, %s109
      %p120 = scmp.eq.s32.totalorder %s32, 0
      %p121 = por %p119, %p120
      %p122 = scmp.ne.s32.totalorder %s108, %s109
      %p123 = scmp.eq.s32.totalorder %s33, 1
      %p124 = por %p122, %p123
      %p126 = scmp.ne.s32.totalorder %s109, %s125
      %p127 = scmp.eq.s32.totalorder %s33, 0
      %p128 = por %p126, %p127
      %s129 = ssub.s32 %s34, %s46
      %p130 = scmp.eq.s32.totalorder %s129, 0
      %s132 = sadd.s32 %s131, 1
      %s133 = scalar_select %p130, %s131, %s132
      %p136 = pneg %p130
      %p137 = scmp.eq.s32.totalorder %s27, 1
      %p138 = por %p136, %p137
      %p139 = scmp.ne.s32.totalorder %s131, %s134
      %p140 = scmp.eq.s32.totalorder %s27, 0
      %p141 = por %p139, %p140
      %p142 = scmp.ne.s32.totalorder %s131, %s134
      %p143 = scmp.eq.s32.totalorder %s32, 1
      %p144 = por %p142, %p143
      %p145 = scmp.ne.s32.totalorder %s134, %s135
      %p146 = scmp.eq.s32.totalorder %s32, 0
      %p147 = por %p145, %p146
      %p148 = scmp.ne.s32.totalorder %s134, %s135
      %p149 = scmp.eq.s32.totalorder %s33, 1
      %p150 = por %p148, %p149
      %p152 = scmp.ne.s32.totalorder %s135, %s151
      %p153 = scmp.eq.s32.totalorder %s33, 0
      %p154 = por %p152, %p153
      %s155 = ssub.s32 %s34, %s46
      %p156 = scmp.eq.s32.totalorder %s155, 0
      %s158 = sadd.s32 %s157, 1
      %s159 = scalar_select %p156, %s157, %s158
      %p162 = pneg %p156
      %p163 = scmp.eq.s32.totalorder %s27, 1
      %p164 = por %p162, %p163
      %p165 = scmp.ne.s32.totalorder %s157, %s160
      %p166 = scmp.eq.s32.totalorder %s27, 0
      %p167 = por %p165, %p166
      %p168 = scmp.ne.s32.totalorder %s157, %s160
      %p169 = scmp.eq.s32.totalorder %s32, 1
      %p170 = por %p168, %p169
      %p171 = scmp.ne.s32.totalorder %s160, %s161
      %p172 = scmp.eq.s32.totalorder %s32, 0
      %p173 = por %p171, %p172
      %p174 = scmp.ne.s32.totalorder %s160, %s161
      %p175 = scmp.eq.s32.totalorder %s33, 1
      %p176 = por %p174, %p175
      %p178 = scmp.ne.s32.totalorder %s161, %s177
      %p179 = scmp.eq.s32.totalorder %s33, 0
      %p180 = por %p178, %p179
      %s182 = sadd.s32 %s181, 1
      %p185 = scmp.eq.s32.totalorder %s27, 1
      %p186 = scmp.ne.s32.totalorder %s181, %s183
      %p187 = scmp.eq.s32.totalorder %s27, 0
      %p188 = por %p186, %p187
      %p189 = scmp.ne.s32.totalorder %s181, %s183
      %p190 = scmp.eq.s32.totalorder %s32, 1
      %p191 = por %p189, %p190
      %p192 = scmp.ne.s32.totalorder %s183, %s184
      %p193 = scmp.eq.s32.totalorder %s32, 0
      %p194 = por %p192, %p193
      %p195 = scmp.ne.s32.totalorder %s183, %s184
      %p196 = scmp.eq.s32.totalorder %s33, 1
      %p197 = por %p195, %p196
      %p199 = scmp.ne.s32.totalorder %s184, %s198
      %p200 = scmp.eq.s32.totalorder %s33, 0
      %p201 = por %p199, %p200
      %s203 = sadd.s32 %s202, 1
      %p206 = scmp.eq.s32.totalorder %s27, 1
      %p207 = scmp.ne.s32.totalorder %s202, %s204
      %p208 = scmp.eq.s32.totalorder %s27, 0
      %p209 = por %p207, %p208
      %p210 = scmp.ne.s32.totalorder %s202, %s204
      %p211 = scmp.eq.s32.totalorder %s32, 1
      %p212 = por %p210, %p211
      %p213 = scmp.ne.s32.totalorder %s204, %s205
      %p214 = scmp.eq.s32.totalorder %s32, 0
      %p215 = por %p213, %p214
      %p216 = scmp.ne.s32.totalorder %s204, %s205
      %p217 = scmp.eq.s32.totalorder %s33, 1
      %p218 = por %p216, %p217
      %p220 = scmp.ne.s32.totalorder %s205, %s219
      %p221 = scmp.eq.s32.totalorder %s33, 0
      %p222 = por %p220, %p221
      %s224 = sadd.s32 %s223, 1
      %p227 = scmp.eq.s32.totalorder %s27, 1
      %p228 = scmp.ne.s32.totalorder %s223, %s225
      %p229 = scmp.eq.s32.totalorder %s27, 0
      %p230 = por %p228, %p229
      %p231 = scmp.ne.s32.totalorder %s223, %s225
      %p232 = scmp.eq.s32.totalorder %s32, 1
      %p233 = por %p231, %p232
      %p234 = scmp.ne.s32.totalorder %s225, %s226
      %p235 = scmp.eq.s32.totalorder %s32, 0
      %p236 = por %p234, %p235
      %p237 = scmp.ne.s32.totalorder %s225, %s226
      %p238 = scmp.eq.s32.totalorder %s33, 1
      %p239 = por %p237, %p238
      %p241 = scmp.ne.s32.totalorder %s226, %s240
      %p242 = scmp.eq.s32.totalorder %s33, 0
      %p243 = por %p241, %p242
      %s245 = sadd.s32 %s244, 1
      %p248 = scmp.eq.s32.totalorder %s27, 1
      %p249 = scmp.ne.s32.totalorder %s244, %s246
      %p250 = scmp.eq.s32.totalorder %s27, 0
      %p251 = por %p249, %p250
      %p252 = scmp.ne.s32.totalorder %s244, %s246
      %p253 = scmp.eq.s32.totalorder %s32, 1
      %p254 = por %p252, %p253
      %p255 = scmp.ne.s32.totalorder %s246, %s247
      %p256 = scmp.eq.s32.totalorder %s32, 0
      %p257 = por %p255, %p256
      %p258 = scmp.ne.s32.totalorder %s246, %s247
      %p259 = scmp.eq.s32.totalorder %s33, 1
      %p260 = por %p258, %p259
      %p262 = scmp.ne.s32.totalorder %s247, %s261
      %p263 = scmp.eq.s32.totalorder %s33, 0
      %p264 = por %p262, %p263
      %s265 = ssub.s32 %s34, %s46
      %s266 = ssub.s32 %s35, %s42
      %s267 = sor.u32 %s265, %s266
      %p268 = scmp.eq.s32.totalorder %s267, 0
      %s270 = sadd.s32 %s269, 1
      %s271 = scalar_select %p268, %s269, %s270
      %p274 = pneg %p268
      %p275 = scmp.eq.s32.totalorder %s27, 1
      %p276 = por %p274, %p275
      %p277 = scmp.ne.s32.totalorder %s269, %s272
      %p278 = scmp.eq.s32.totalorder %s27, 0
      %p279 = por %p277, %p278
      %p280 = scmp.ne.s32.totalorder %s269, %s272
      %p281 = scmp.eq.s32.totalorder %s32, 1
      %p282 = por %p280, %p281
      %p283 = scmp.ne.s32.totalorder %s272, %s273
      %p284 = scmp.eq.s32.totalorder %s32, 0
      %p285 = por %p283, %p284
      %p286 = scmp.ne.s32.totalorder %s272, %s273
      %p287 = scmp.eq.s32.totalorder %s33, 1
      %p288 = por %p286, %p287
      %p290 = scmp.ne.s32.totalorder %s273, %s289
      %p291 = scmp.eq.s32.totalorder %s33, 0
      %p292 = por %p290, %p291
      %p293 = scmp.le.s32.totalorder 1, %s27
      %p294 = scmp.lt.s32.totalorder %s27, 3
      %p295 = pnand %p293, %p294
      %p296 = pneg %p295
      // Predicated region
      $region9: #{tpu_custom_call.1} parent=5 // pred_check
        _
      $region10: #{tpu_custom_call.1} parent=5 // pred_check_branch
        %298 = sbr.rel (%p295) target = $region12
      $region11: #{tpu_custom_call.1} parent=5 // pred_region
        %s299 = ssub.s32 %s27, 1
        // Predicated region
        $region13: #{tpu_custom_call.1} parent=11 // pred_check
          %p300 = pneg %p194
        $region14: #{tpu_custom_call.1} parent=11 // pred_check_branch
          %302 = sbr.rel (%p300) target = $region16
        $region15: #{tpu_custom_call.1} parent=11 // pred_region
          _
        $region16: #{tpu_custom_call.1} parent=11 // pred_fallthru
          _
        // Predicated region
        $region17: #{tpu_custom_call.1} parent=11 // pred_check
          %p303 = pneg %p215
        $region18: #{tpu_custom_call.1} parent=11 // pred_check_branch
          %305 = sbr.rel (%p303) target = $region20
        $region19: #{tpu_custom_call.1} parent=11 // pred_region
          _
        $region20: #{tpu_custom_call.1} parent=11 // pred_fallthru
          _
        // Predicated region
        $region21: #{tpu_custom_call.1} parent=11 // pred_check
          %p306 = pneg %p236
        $region22: #{tpu_custom_call.1} parent=11 // pred_check_branch
          %308 = sbr.rel (%p306) target = $region24
        $region23: #{tpu_custom_call.1} parent=11 // pred_region
          _
        $region24: #{tpu_custom_call.1} parent=11 // pred_fallthru
          _
        // Predicated region
        $region25: #{tpu_custom_call.1} parent=11 // pred_check
          %p309 = pneg %p257
        $region26: #{tpu_custom_call.1} parent=11 // pred_check_branch
          %311 = sbr.rel (%p309) target = $region28
        $region27: #{tpu_custom_call.1} parent=11 // pred_region
          _
        $region28: #{tpu_custom_call.1} parent=11 // pred_fallthru
          _
      $region12: #{tpu_custom_call.1} parent=5 // pred_fallthru
        _
      %p312 = scmp.lt.s32.totalorder %s27, 2
      // Predicated region
      $region29: #{tpu_custom_call.1} parent=5 // pred_check
        %p313 = pneg %p312
      $region30: #{tpu_custom_call.1} parent=5 // pred_check_branch
        %315 = sbr.rel (%p313) target = $region32
      $region31: #{tpu_custom_call.1} parent=5 // pred_region
        // Predicated region
        $region33: #{tpu_custom_call.1} parent=31 // pred_check
          %p316 = pneg %p61
        $region34: #{tpu_custom_call.1} parent=31 // pred_check_branch
          %318 = sbr.rel (%p316) target = $region36
        $region35: #{tpu_custom_call.1} parent=31 // pred_region
          %s319 = sand.u32 %s51, 1
          %s320 = scalar_lea.sflag [#allocation3], %s319
          %s321 = sand.u32 %s51, 1
          %s322 = smul.addr %s321, 8
          %s323 = scalar_lea.vmem [#allocation2], %s322
          %s325 = ssub.s32 128, 128
          %326 = vsyncadd %s320, %s325
          %s327 = sadd.s32 %s35, %s34
          %s328 = smul.addr %s327, 128
          %s329 = scalar_lea.hbm %s0, %s328
          %s331 = sshll.u32 %s323, 4
          %s332 = int_to_ptr.vmem [resolvable:$true] %s331
          %334 = dma.hbm_to_vmem [thread:$0]  %s329, 128, %s332, %s320
        $region36: #{tpu_custom_call.1} parent=31 // pred_fallthru
          _
        // Predicated region
        $region37: #{tpu_custom_call.1} parent=31 // pred_check
          %p335 = pneg %p87
        $region38: #{tpu_custom_call.1} parent=31 // pred_check_branch
          %337 = sbr.rel (%p335) target = $region40
        $region39: #{tpu_custom_call.1} parent=31 // pred_region
          %p338 = scmp.lt.s32.totalorder %s34, 1
          %s339 = scalar_select %p338, %s34, 1
          %s340 = scalar_lea.vmem %s1, %s339
        $region40: #{tpu_custom_call.1} parent=31 // pred_fallthru
          _
        // Predicated region
        $region41: #{tpu_custom_call.1} parent=31 // pred_check
          %p341 = pneg %p115
        $region42: #{tpu_custom_call.1} parent=31 // pred_check_branch
          %343 = sbr.rel (%p341) target = $region44
        $region43: #{tpu_custom_call.1} parent=31 // pred_region
          %s344 = sand.u32 %s27, 1
          %s345 = scalar_lea.sflag [#allocation6], %s344
          %s346 = sand.u32 %s105, 1
          %s347 = smul.addr %s346, 16
          %s348 = scalar_lea.vmem [#allocation5], %s347
          %s350 = ssub.s32 256, 256
          %351 = vsyncadd %s345, %s350
          %s352 = smul.addr %s34, 4
          %s353 = sadd.s32 %s35, %s352
          %s354 = smul.addr %s353, 64
          %s355 = scalar_lea.hbm %s2, %s354
          %s356 = sshll.u32 %s348, 4
          %s357 = int_to_ptr.vmem [resolvable:$true] %s356
          %362 = dma.hbm_to_vmem [thread:$0]  %s355, 256, %s357, %s345, 64, 64, 4
        $region44: #{tpu_custom_call.1} parent=31 // pred_fallthru
          _
        // Predicated region
        $region45: #{tpu_custom_call.1} parent=31 // pred_check
          %p363 = pneg %p141
        $region46: #{tpu_custom_call.1} parent=31 // pred_check_branch
          %365 = sbr.rel (%p363) target = $region48
        $region47: #{tpu_custom_call.1} parent=31 // pred_region
          %s366 = sand.u32 %s27, 1
          %s367 = scalar_lea.sflag [#allocation6], %s366
          %s368 = sand.u32 %s131, 1
          %s369 = smul.addr %s368, 16
          %s370 = scalar_lea.vmem [#allocation7], %s369
          %s372 = ssub.s32 256, 256
          %373 = vsyncadd %s367, %s372
          %s374 = smul.addr %s34, 4
          %s375 = smul.addr %s374, 64
          %s376 = scalar_lea.hbm %s3, %s375
          %s377 = sshll.u32 %s370, 4
          %s378 = int_to_ptr.vmem [resolvable:$true] %s377
          %383 = dma.hbm_to_vmem [thread:$0]  %s376, 256, %s378, %s367, 64, 64, 4
        $region48: #{tpu_custom_call.1} parent=31 // pred_fallthru
          _
        // Predicated region
        $region49: #{tpu_custom_call.1} parent=31 // pred_check
          %p384 = pneg %p167
        $region50: #{tpu_custom_call.1} parent=31 // pred_check_branch
          %386 = sbr.rel (%p384) target = $region52
        $region51: #{tpu_custom_call.1} parent=31 // pred_region
          %s387 = sand.u32 %s157, 1
          %s388 = scalar_lea.sflag [#allocation9], %s387
          %s389 = sand.u32 %s157, 1
          %s390 = smul.addr %s389, 16
          %s391 = scalar_lea.vmem [#allocation8], %s390
          %s393 = ssub.s32 256, 256
          %394 = vsyncadd %s388, %s393
          %s395 = smul.addr %s34, 4
          %s396 = smul.addr %s395, 64
          %s397 = scalar_lea.hbm %s4, %s396
          %s398 = sshll.u32 %s391, 4
          %s399 = int_to_ptr.vmem [resolvable:$true] %s398
          %404 = dma.hbm_to_vmem [thread:$0]  %s397, 256, %s399, %s388, 64, 64, 4
        $region52: #{tpu_custom_call.1} parent=31 // pred_fallthru
          _
      $region32: #{tpu_custom_call.1} parent=5 // pred_fallthru
        _
      %p405 = scmp.le.s32.totalorder 1, %s27
      %p406 = scmp.lt.s32.totalorder %s27, 3
      %p407 = pnand %p405, %p406
      %p408 = pneg %p407
      // Predicated region
      $region53: #{tpu_custom_call.1} parent=5 // pred_check
        _
      $region54: #{tpu_custom_call.1} parent=5 // pred_check_branch
        %410 = sbr.rel (%p407) target = $region56
      $region55: #{tpu_custom_call.1} parent=5 // pred_region
        %s411 = ssub.s32 %s27, 1
        %s412 = sand.u32 %s54, 1
        %s413 = scalar_lea.sflag [#allocation3], %s412
        %s414 = sand.u32 %s54, 1
        %s415 = smul.addr %s414, 8
        %s416 = scalar_lea.vmem [#allocation2], %s415
        // Predicated region
        $region57: #{tpu_custom_call.1} parent=55 // pred_check
          %p417 = pneg %p67
        $region58: #{tpu_custom_call.1} parent=55 // pred_check_branch
          %419 = sbr.rel (%p417) target = $region60
        $region59: #{tpu_custom_call.1} parent=55 // pred_region
          %420 = dma.done %s413, 128
        $region60: #{tpu_custom_call.1} parent=55 // pred_fallthru
          _
        %s421 = sand.u32 %s32, 1
        %s422 = scalar_lea.sflag [#allocation6], %s421
        %s423 = sand.u32 %s108, 1
        %s424 = smul.addr %s423, 16
        %s425 = scalar_lea.vmem [#allocation5], %s424
        // Predicated region
        $region61: #{tpu_custom_call.1} parent=55 // pred_check
          %p426 = pneg %p121
        $region62: #{tpu_custom_call.1} parent=55 // pred_check_branch
          %428 = sbr.rel (%p426) target = $region64
        $region63: #{tpu_custom_call.1} parent=55 // pred_region
          %429 = dma.done %s422, 256
        $region64: #{tpu_custom_call.1} parent=55 // pred_fallthru
          _
        %s430 = sand.u32 %s32, 1
        %s431 = scalar_lea.sflag [#allocation6], %s430
        %s432 = sand.u32 %s134, 1
        %s433 = smul.addr %s432, 16
        %s434 = scalar_lea.vmem [#allocation7], %s433
        // Predicated region
        $region65: #{tpu_custom_call.1} parent=55 // pred_check
          %p435 = pneg %p147
        $region66: #{tpu_custom_call.1} parent=55 // pred_check_branch
          %437 = sbr.rel (%p435) target = $region68
        $region67: #{tpu_custom_call.1} parent=55 // pred_region
          %438 = dma.done %s431, 256
        $region68: #{tpu_custom_call.1} parent=55 // pred_fallthru
          _
        %s439 = sand.u32 %s160, 1
        %s440 = scalar_lea.sflag [#allocation9], %s439
        %s441 = sand.u32 %s160, 1
        %s442 = smul.addr %s441, 16
        %s443 = scalar_lea.vmem [#allocation8], %s442
        // Predicated region
        $region69: #{tpu_custom_call.1} parent=55 // pred_check
          %p444 = pneg %p173
        $region70: #{tpu_custom_call.1} parent=55 // pred_check_branch
          %446 = sbr.rel (%p444) target = $region72
        $region71: #{tpu_custom_call.1} parent=55 // pred_region
          %447 = dma.done %s440, 256
        $region72: #{tpu_custom_call.1} parent=55 // pred_fallthru
          _
        %s448 = sand.u32 %s54, 1
        %s449 = scalar_lea.sflag [#allocation3], %s448
        %s450 = sand.u32 %s54, 1
        %s451 = smul.addr %s450, 8
        %s452 = scalar_lea.vmem [#allocation2], %s451
        %p453 = pneg %p67
        %p454 = pneg %p64
        %p455 = scmp.lt.s32.totalorder %s36, 1
        %s456 = scalar_select %p455, %s36, 1
        %s457 = scalar_lea.vmem %s1, %s456
        %p458 = pneg %p93
        %p459 = pneg %p90
        %s460 = sand.u32 %s32, 1
        %s461 = scalar_lea.sflag [#allocation6], %s460
        %s462 = sand.u32 %s108, 1
        %s463 = smul.addr %s462, 16
        %s464 = scalar_lea.vmem [#allocation5], %s463
        %p465 = pneg %p121
        %p466 = pneg %p118
        %s467 = sand.u32 %s32, 1
        %s468 = scalar_lea.sflag [#allocation6], %s467
        %s469 = sand.u32 %s134, 1
        %s470 = smul.addr %s469, 16
        %s471 = scalar_lea.vmem [#allocation7], %s470
        %p472 = pneg %p147
        %p473 = pneg %p144
        %s474 = sand.u32 %s160, 1
        %s475 = scalar_lea.sflag [#allocation9], %s474
        %s476 = sand.u32 %s160, 1
        %s477 = smul.addr %s476, 16
        %s478 = scalar_lea.vmem [#allocation8], %s477
        %p479 = pneg %p173
        %p480 = pneg %p170
        %p481 = pneg %p194
        %p482 = pneg %p191
        %p483 = pneg %p215
        %p484 = pneg %p212
        %p485 = pneg %p236
        %p486 = pneg %p233
        %p487 = pneg %p257
        %p488 = pneg %p254
        %p489 = pneg %p285
        %p490 = pneg %p282
        %s491 = sand.u32 %s272, 1
        %s492 = scalar_lea.sflag [#allocation4], %s491
        %s493 = sand.u32 %s272, 1
        %s494 = smul.addr %s493, 8
        %s495 = scalar_lea.vmem [#allocation10], %s494
        %p496 = scmp.lt.s32.totalorder %s36, 1
        %s497 = scalar_select %p496, %s36, 1
        %s498 = scalar_lea.vmem %s1, %s497
        %v500 = vld [vmem:[%s416] sm:$0xff]
        %v501 = vld [vmem:[%s425] sm:$0xf]
        %v502 = vld [vmem:[%s425 + $0x4] sm:$0xf]
        %v503 = vld [vmem:[%s425 + $0x8] sm:$0xf]
        %v504 = vld [vmem:[%s425 + $0xc] sm:$0xf]
        %v505 = vld [vmem:[%s434] sm:$0xf]
        %v506 = vld [vmem:[%s434 + $0x4] sm:$0xf]
        %v507 = vld [vmem:[%s434 + $0x8] sm:$0xf]
        %v508 = vld [vmem:[%s434 + $0xc] sm:$0xf]
        %v509 = vld [vmem:[%s443] sm:$0xf]
        %v510 = vld [vmem:[%s443 + $0x4] sm:$0xf]
        %v511 = vld [vmem:[%s443 + $0x8] sm:$0xf]
        %v512 = vld [vmem:[%s443 + $0xc] sm:$0xf]
        %v513 = vld [vmem:[%s498] sm:$0x1]
        %v515 = vlaneseq
        %v516 = vshrl.u32 %v515, 7
        %v517 = vsub.s32 0, %v516
        %v518 = vrot.slane %v513, %v517
        %vm520 = vcmask 64512
        %v522 = vsel %vm520, %v501, 0
        %v525 = vsel %vm520, %v505, 0
        %527 = vmatprep.subr.bf16.mxu0 0
        %528 = vmatpush1.bf16.xpose.msra.mxu0 %v525
        %529 = vmatprep.subr.bf16.mxu0 0
        %530 = vmatpush1.bf16.xpose.msra.mxu0 0
        %531 = vmatprep.subr.bf16.mxu0 0
        %532 = vmatpush1.bf16.xpose.msra.mxu0 0
        %533 = vmatprep.subr.bf16.mxu0 0
        %534 = vmatpush1.bf16.xpose.msra.mxu0 0
        %535 = vmatprep.subr.bf16.mxu0 0
        %536 = vmatpush1.bf16.xpose.msra.mxu0 0
        %537 = vmatprep.subr.bf16.mxu0 0
        %538 = vmatpush1.bf16.xpose.msra.mxu0 0
        %539 = vmatprep.subr.bf16.mxu0 0
        %540 = vmatpush1.bf16.xpose.msra.mxu0 0
        %541 = vmatprep.subr.bf16.mxu0 0
        %542 = vmatpush1.bf16.xpose.msra.mxu0 0
        %543 = vmatprep.subr.bf16.mxu0 0
        %544 = vmatpush1.bf16.xpose.msra.mxu0 0
        %545 = vmatprep.subr.bf16.mxu0 0
        %546 = vmatpush1.bf16.xpose.msra.mxu0 0
        %547 = vmatprep.subr.bf16.mxu0 0
        %548 = vmatpush1.bf16.xpose.msra.mxu0 0
        %549 = vmatprep.subr.bf16.mxu0 0
        %550 = vmatpush1.bf16.xpose.msra.mxu0 0
        %551 = vmatprep.subr.bf16.mxu0 0
        %552 = vmatpush1.bf16.xpose.msra.mxu0 0
        %553 = vmatprep.subr.bf16.mxu0 0
        %554 = vmatpush1.bf16.xpose.msra.mxu0 0
        %555 = vmatprep.subr.bf16.mxu0 0
        %556 = vmatpush1.bf16.xpose.msra.mxu0 0
        %557 = vmatprep.subr.bf16.mxu0 0
        %558 = vmatpush1.bf16.xpose.msra.mxu0 0
        %559 = vmatprep.mubr.bf16.mxu0 0
        %560 = vmatmul.mubr.bf16.gmra.mrb[0].mxu0 %v522
        %v561 = vpop.f32.mrb[0].mxu0
        %v562 = vadd.f32 %v518, %v561
        %v563 = vpop.f32.mrb[0].mxu0
        %v564 = vpop.f32.mrb[0].mxu0
        %v565 = vpop.f32.mrb[0].mxu0
        %566 = vdwg.mxu0
        %v568 = vsel %vm520, %v502, 0
        %v571 = vsel %vm520, %v506, 0
        %573 = vmatprep.subr.bf16.mxu0 0
        %574 = vmatpush1.bf16.xpose.msra.mxu0 %v571
        %575 = vmatprep.subr.bf16.mxu0 0
        %576 = vmatpush1.bf16.xpose.msra.mxu0 0
        %577 = vmatprep.subr.bf16.mxu0 0
        %578 = vmatpush1.bf16.xpose.msra.mxu0 0
        %579 = vmatprep.subr.bf16.mxu0 0
        %580 = vmatpush1.bf16.xpose.msra.mxu0 0
        %581 = vmatprep.subr.bf16.mxu0 0
        %582 = vmatpush1.bf16.xpose.msra.mxu0 0
        %583 = vmatprep.subr.bf16.mxu0 0
        %584 = vmatpush1.bf16.xpose.msra.mxu0 0
        %585 = vmatprep.subr.bf16.mxu0 0
        %586 = vmatpush1.bf16.xpose.msra.mxu0 0
        %587 = vmatprep.subr.bf16.mxu0 0
        %588 = vmatpush1.bf16.xpose.msra.mxu0 0
        %589 = vmatprep.subr.bf16.mxu0 0
        %590 = vmatpush1.bf16.xpose.msra.mxu0 0
        %591 = vmatprep.subr.bf16.mxu0 0
        %592 = vmatpush1.bf16.xpose.msra.mxu0 0
        %593 = vmatprep.subr.bf16.mxu0 0
        %594 = vmatpush1.bf16.xpose.msra.mxu0 0
        %595 = vmatprep.subr.bf16.mxu0 0
        %596 = vmatpush1.bf16.xpose.msra.mxu0 0
        %597 = vmatprep.subr.bf16.mxu0 0
        %598 = vmatpush1.bf16.xpose.msra.mxu0 0
        %599 = vmatprep.subr.bf16.mxu0 0
        %600 = vmatpush1.bf16.xpose.msra.mxu0 0
        %601 = vmatprep.subr.bf16.mxu0 0
        %602 = vmatpush1.bf16.xpose.msra.mxu0 0
        %603 = vmatprep.subr.bf16.mxu0 0
        %604 = vmatpush1.bf16.xpose.msra.mxu0 0
        %605 = vmatprep.mubr.bf16.mxu0 0
        %606 = vmatmul.mubr.bf16.gmra.mrb[0].mxu0 %v568
        %v607 = vpop.f32.mrb[0].mxu0
        %v608 = vadd.f32 %v518, %v607
        %v609 = vpop.f32.mrb[0].mxu0
        %v610 = vpop.f32.mrb[0].mxu0
        %v611 = vpop.f32.mrb[0].mxu0
        %612 = vdwg.mxu0
        %v614 = vsel %vm520, %v503, 0
        %v617 = vsel %vm520, %v507, 0
        %619 = vmatprep.subr.bf16.mxu0 0
        %620 = vmatpush1.bf16.xpose.msra.mxu0 %v617
        %621 = vmatprep.subr.bf16.mxu0 0
        %622 = vmatpush1.bf16.xpose.msra.mxu0 0
        %623 = vmatprep.subr.bf16.mxu0 0
        %624 = vmatpush1.bf16.xpose.msra.mxu0 0
        %625 = vmatprep.subr.bf16.mxu0 0
        %626 = vmatpush1.bf16.xpose.msra.mxu0 0
        %627 = vmatprep.subr.bf16.mxu0 0
        %628 = vmatpush1.bf16.xpose.msra.mxu0 0
        %629 = vmatprep.subr.bf16.mxu0 0
        %630 = vmatpush1.bf16.xpose.msra.mxu0 0
        %631 = vmatprep.subr.bf16.mxu0 0
        %632 = vmatpush1.bf16.xpose.msra.mxu0 0
        %633 = vmatprep.subr.bf16.mxu0 0
        %634 = vmatpush1.bf16.xpose.msra.mxu0 0
        %635 = vmatprep.subr.bf16.mxu0 0
        %636 = vmatpush1.bf16.xpose.msra.mxu0 0
        %637 = vmatprep.subr.bf16.mxu0 0
        %638 = vmatpush1.bf16.xpose.msra.mxu0 0
        %639 = vmatprep.subr.bf16.mxu0 0
        %640 = vmatpush1.bf16.xpose.msra.mxu0 0
        %641 = vmatprep.subr.bf16.mxu0 0
        %642 = vmatpush1.bf16.xpose.msra.mxu0 0
        %643 = vmatprep.subr.bf16.mxu0 0
        %644 = vmatpush1.bf16.xpose.msra.mxu0 0
        %645 = vmatprep.subr.bf16.mxu0 0
        %646 = vmatpush1.bf16.xpose.msra.mxu0 0
        %647 = vmatprep.subr.bf16.mxu0 0
        %648 = vmatpush1.bf16.xpose.msra.mxu0 0
        %649 = vmatprep.subr.bf16.mxu0 0
        %650 = vmatpush1.bf16.xpose.msra.mxu0 0
        %651 = vmatprep.mubr.bf16.mxu0 0
        %652 = vmatmul.mubr.bf16.gmra.mrb[0].mxu0 %v614
        %v653 = vpop.f32.mrb[0].mxu0
        %v654 = vadd.f32 %v518, %v653
        %v655 = vpop.f32.mrb[0].mxu0
        %v656 = vpop.f32.mrb[0].mxu0
        %v657 = vpop.f32.mrb[0].mxu0
        %658 = vdwg.mxu0
        %v660 = vsel %vm520, %v504, 0
        %v663 = vsel %vm520, %v508, 0
        %665 = vmatprep.subr.bf16.mxu0 0
        %666 = vmatpush1.bf16.xpose.msra.mxu0 %v663
        %667 = vmatprep.subr.bf16.mxu0 0
        %668 = vmatpush1.bf16.xpose.msra.mxu0 0
        %669 = vmatprep.subr.bf16.mxu0 0
        %670 = vmatpush1.bf16.xpose.msra.mxu0 0
        %671 = vmatprep.subr.bf16.mxu0 0
        %672 = vmatpush1.bf16.xpose.msra.mxu0 0
        %673 = vmatprep.subr.bf16.mxu0 0
        %674 = vmatpush1.bf16.xpose.msra.mxu0 0
        %675 = vmatprep.subr.bf16.mxu0 0
        %676 = vmatpush1.bf16.xpose.msra.mxu0 0
        %677 = vmatprep.subr.bf16.mxu0 0
        %678 = vmatpush1.bf16.xpose.msra.mxu0 0
        %679 = vmatprep.subr.bf16.mxu0 0
        %680 = vmatpush1.bf16.xpose.msra.mxu0 0
        %681 = vmatprep.subr.bf16.mxu0 0
        %682 = vmatpush1.bf16.xpose.msra.mxu0 0
        %683 = vmatprep.subr.bf16.mxu0 0
        %684 = vmatpush1.bf16.xpose.msra.mxu0 0
        %685 = vmatprep.subr.bf16.mxu0 0
        %686 = vmatpush1.bf16.xpose.msra.mxu0 0
        %687 = vmatprep.subr.bf16.mxu0 0
        %688 = vmatpush1.bf16.xpose.msra.mxu0 0
        %689 = vmatprep.subr.bf16.mxu0 0
        %690 = vmatpush1.bf16.xpose.msra.mxu0 0
        %691 = vmatprep.subr.bf16.mxu0 0
        %692 = vmatpush1.bf16.xpose.msra.mxu0 0
        %693 = vmatprep.subr.bf16.mxu0 0
        %694 = vmatpush1.bf16.xpose.msra.mxu0 0
        %695 = vmatprep.subr.bf16.mxu0 0
        %696 = vmatpush1.bf16.xpose.msra.mxu0 0
        %697 = vmatprep.mubr.bf16.mxu0 0
        %698 = vmatmul.mubr.bf16.gmra.mrb[0].mxu0 %v660
        %v699 = vpop.f32.mrb[0].mxu0
        %v700 = vadd.f32 %v518, %v699
        %v701 = vpop.f32.mrb[0].mxu0
        %v702 = vpop.f32.mrb[0].mxu0
        %v703 = vpop.f32.mrb[0].mxu0
        %704 = vdwg.mxu0
        %v705 = vsel %vm520, %v562, -inf
        %706 = vmax.xlane.f32.xlu0 %v705
        %v707 = vpop.xlane.xlu0 %706
        %v708 = vsel %vm520, %v608, -inf
        %709 = vmax.xlane.f32.xlu0 %v708
        %v710 = vpop.xlane.xlu0 %709
        %v711 = vsel %vm520, %v654, -inf
        %712 = vmax.xlane.f32.xlu0 %v711
        %v713 = vpop.xlane.xlu0 %712
        %v714 = vsel %vm520, %v700, -inf
        %715 = vmax.xlane.f32.xlu0 %v714
        %v716 = vpop.xlane.xlu0 %715
        %v717 = vsub.f32 %v562, %v707
        %v718 = vsub.f32 %v608, %v710
        %v719 = vsub.f32 %v654, %v713
        %v720 = vsub.f32 %v700, %v716
        %v721 = vmul.f32 %v717, 1.442695
        %v722 = vpow.pop %v721
        %v723 = vmul.f32 %v718, 1.442695
        %v724 = vpow.pop %v723
        %v725 = vmul.f32 %v719, 1.442695
        %v726 = vpow.pop %v725
        %v727 = vmul.f32 %v720, 1.442695
        %v728 = vpow.pop %v727
        %v729 = vsel %vm520, %v722, 0.0
        %730 = vadd.xlane.f32.xlu0 %v729
        %v731 = vpop.xlane.xlu0 %730
        %v732 = vsel %vm520, %v724, 0.0
        %733 = vadd.xlane.f32.xlu0 %v732
        %v734 = vpop.xlane.xlu0 %733
        %v735 = vsel %vm520, %v726, 0.0
        %736 = vadd.xlane.f32.xlu0 %v735
        %v737 = vpop.xlane.xlu0 %736
        %v738 = vsel %vm520, %v728, 0.0
        %739 = vadd.xlane.f32.xlu0 %v738
        %v740 = vpop.xlane.xlu0 %739
        %v741 = vrcp.pop %v731
        %v742 = vrcp.pop %v734
        %v743 = vrcp.pop %v737
        %v744 = vrcp.pop %v740
        %v745 = vmul.f32 %v722, %v741
        %v746 = vmul.f32 %v724, %v742
        %v747 = vmul.f32 %v726, %v743
        %v748 = vmul.f32 %v728, %v744
        %v749 = vpack.c.bf16 %v745, %v745
        %v750 = vpack.c.bf16 %v746, %v746
        %v751 = vpack.c.bf16 %v747, %v747
        %v752 = vpack.c.bf16 %v748, %v748
        %v754 = vsel %vm520, %v749, 0
        %vm756 = vcmask 1043456
        %v758 = vsel %vm756, %v509, 0
        %760 = vmatprep.subr.bf16.mxu0 0
        %761 = vmatpush1.bf16.msra.mxu0 %v758
        %762 = vmatprep.subr.bf16.mxu0 0
        %763 = vmatpush1.bf16.msra.mxu0 0
        %764 = vmatprep.subr.bf16.mxu0 0
        %765 = vmatpush1.bf16.msra.mxu0 0
        %766 = vmatprep.subr.bf16.mxu0 0
        %767 = vmatpush1.bf16.msra.mxu0 0
        %768 = vmatprep.subr.bf16.mxu0 0
        %769 = vmatpush1.bf16.msra.mxu0 0
        %770 = vmatprep.subr.bf16.mxu0 0
        %771 = vmatpush1.bf16.msra.mxu0 0
        %772 = vmatprep.subr.bf16.mxu0 0
        %773 = vmatpush1.bf16.msra.mxu0 0
        %774 = vmatprep.subr.bf16.mxu0 0
        %775 = vmatpush1.bf16.msra.mxu0 0
        %776 = vmatprep.subr.bf16.mxu0 0
        %777 = vmatpush1.bf16.msra.mxu0 0
        %778 = vmatprep.subr.bf16.mxu0 0
        %779 = vmatpush1.bf16.msra.mxu0 0
        %780 = vmatprep.subr.bf16.mxu0 0
        %781 = vmatpush1.bf16.msra.mxu0 0
        %782 = vmatprep.subr.bf16.mxu0 0
        %783 = vmatpush1.bf16.msra.mxu0 0
        %784 = vmatprep.subr.bf16.mxu0 0
        %785 = vmatpush1.bf16.msra.mxu0 0
        %786 = vmatprep.subr.bf16.mxu0 0
        %787 = vmatpush1.bf16.msra.mxu0 0
        %788 = vmatprep.subr.bf16.mxu0 0
        %789 = vmatpush1.bf16.msra.mxu0 0
        %790 = vmatprep.subr.bf16.mxu0 0
        %791 = vmatpush1.bf16.msra.mxu0 0
        %792 = vmatprep.mubr.bf16.mxu0 0
        %793 = vmatmul.mubr.bf16.gmra.mrb[0].mxu0 %v754
        %v794 = vpop.f32.mrb[0].mxu0
        %v795 = vadd.f32 0.0, %v794
        %v796 = vpop.f32.mrb[0].mxu0
        %v797 = vpop.f32.mrb[0].mxu0
        %v798 = vpop.f32.mrb[0].mxu0
        %799 = vdwg.mxu0
        %v801 = vsel %vm520, %v750, 0
        %v804 = vsel %vm756, %v510, 0
        %806 = vmatprep.subr.bf16.mxu0 0
        %807 = vmatpush1.bf16.msra.mxu0 %v804
        %808 = vmatprep.subr.bf16.mxu0 0
        %809 = vmatpush1.bf16.msra.mxu0 0
        %810 = vmatprep.subr.bf16.mxu0 0
        %811 = vmatpush1.bf16.msra.mxu0 0
        %812 = vmatprep.subr.bf16.mxu0 0
        %813 = vmatpush1.bf16.msra.mxu0 0
        %814 = vmatprep.subr.bf16.mxu0 0
        %815 = vmatpush1.bf16.msra.mxu0 0
        %816 = vmatprep.subr.bf16.mxu0 0
        %817 = vmatpush1.bf16.msra.mxu0 0
        %818 = vmatprep.subr.bf16.mxu0 0
        %819 = vmatpush1.bf16.msra.mxu0 0
        %820 = vmatprep.subr.bf16.mxu0 0
        %821 = vmatpush1.bf16.msra.mxu0 0
        %822 = vmatprep.subr.bf16.mxu0 0
        %823 = vmatpush1.bf16.msra.mxu0 0
        %824 = vmatprep.subr.bf16.mxu0 0
        %825 = vmatpush1.bf16.msra.mxu0 0
        %826 = vmatprep.subr.bf16.mxu0 0
        %827 = vmatpush1.bf16.msra.mxu0 0
        %828 = vmatprep.subr.bf16.mxu0 0
        %829 = vmatpush1.bf16.msra.mxu0 0
        %830 = vmatprep.subr.bf16.mxu0 0
        %831 = vmatpush1.bf16.msra.mxu0 0
        %832 = vmatprep.subr.bf16.mxu0 0
        %833 = vmatpush1.bf16.msra.mxu0 0
        %834 = vmatprep.subr.bf16.mxu0 0
        %835 = vmatpush1.bf16.msra.mxu0 0
        %836 = vmatprep.subr.bf16.mxu0 0
        %837 = vmatpush1.bf16.msra.mxu0 0
        %838 = vmatprep.mubr.bf16.mxu0 0
        %839 = vmatmul.mubr.bf16.gmra.mrb[0].mxu0 %v801
        %v840 = vpop.f32.mrb[0].mxu0
        %v841 = vadd.f32 0.0, %v840
        %v842 = vpop.f32.mrb[0].mxu0
        %v843 = vpop.f32.mrb[0].mxu0
        %v844 = vpop.f32.mrb[0].mxu0
        %845 = vdwg.mxu0
        %v847 = vsel %vm520, %v751, 0
        %v850 = vsel %vm756, %v511, 0
        %852 = vmatprep.subr.bf16.mxu0 0
        %853 = vmatpush1.bf16.msra.mxu0 %v850
        %854 = vmatprep.subr.bf16.mxu0 0
        %855 = vmatpush1.bf16.msra.mxu0 0
        %856 = vmatprep.subr.bf16.mxu0 0
        %857 = vmatpush1.bf16.msra.mxu0 0
        %858 = vmatprep.subr.bf16.mxu0 0
        %859 = vmatpush1.bf16.msra.mxu0 0
        %860 = vmatprep.subr.bf16.mxu0 0
        %861 = vmatpush1.bf16.msra.mxu0 0
        %862 = vmatprep.subr.bf16.mxu0 0
        %863 = vmatpush1.bf16.msra.mxu0 0
        %864 = vmatprep.subr.bf16.mxu0 0
        %865 = vmatpush1.bf16.msra.mxu0 0
        %866 = vmatprep.subr.bf16.mxu0 0
        %867 = vmatpush1.bf16.msra.mxu0 0
        %868 = vmatprep.subr.bf16.mxu0 0
        %869 = vmatpush1.bf16.msra.mxu0 0
        %870 = vmatprep.subr.bf16.mxu0 0
        %871 = vmatpush1.bf16.msra.mxu0 0
        %872 = vmatprep.subr.bf16.mxu0 0
        %873 = vmatpush1.bf16.msra.mxu0 0
        %874 = vmatprep.subr.bf16.mxu0 0
        %875 = vmatpush1.bf16.msra.mxu0 0
        %876 = vmatprep.subr.bf16.mxu0 0
        %877 = vmatpush1.bf16.msra.mxu0 0
        %878 = vmatprep.subr.bf16.mxu0 0
        %879 = vmatpush1.bf16.msra.mxu0 0
        %880 = vmatprep.subr.bf16.mxu0 0
        %881 = vmatpush1.bf16.msra.mxu0 0
        %882 = vmatprep.subr.bf16.mxu0 0
        %883 = vmatpush1.bf16.msra.mxu0 0
        %884 = vmatprep.mubr.bf16.mxu0 0
        %885 = vmatmul.mubr.bf16.gmra.mrb[0].mxu0 %v847
        %v886 = vpop.f32.mrb[0].mxu0
        %v887 = vadd.f32 0.0, %v886
        %v888 = vpop.f32.mrb[0].mxu0
        %v889 = vpop.f32.mrb[0].mxu0
        %v890 = vpop.f32.mrb[0].mxu0
        %891 = vdwg.mxu0
        %v893 = vsel %vm520, %v752, 0
        %v896 = vsel %vm756, %v512, 0
        %898 = vmatprep.subr.bf16.mxu0 0
        %899 = vmatpush1.bf16.msra.mxu0 %v896
        %900 = vmatprep.subr.bf16.mxu0 0
        %901 = vmatpush1.bf16.msra.mxu0 0
        %902 = vmatprep.subr.bf16.mxu0 0
        %903 = vmatpush1.bf16.msra.mxu0 0
        %904 = vmatprep.subr.bf16.mxu0 0
        %905 = vmatpush1.bf16.msra.mxu0 0
        %906 = vmatprep.subr.bf16.mxu0 0
        %907 = vmatpush1.bf16.msra.mxu0 0
        %908 = vmatprep.subr.bf16.mxu0 0
        %909 = vmatpush1.bf16.msra.mxu0 0
        %910 = vmatprep.subr.bf16.mxu0 0
        %911 = vmatpush1.bf16.msra.mxu0 0
        %912 = vmatprep.subr.bf16.mxu0 0
        %913 = vmatpush1.bf16.msra.mxu0 0
        %914 = vmatprep.subr.bf16.mxu0 0
        %915 = vmatpush1.bf16.msra.mxu0 0
        %916 = vmatprep.subr.bf16.mxu0 0
        %917 = vmatpush1.bf16.msra.mxu0 0
        %918 = vmatprep.subr.bf16.mxu0 0
        %919 = vmatpush1.bf16.msra.mxu0 0
        %920 = vmatprep.subr.bf16.mxu0 0
        %921 = vmatpush1.bf16.msra.mxu0 0
        %922 = vmatprep.subr.bf16.mxu0 0
        %923 = vmatpush1.bf16.msra.mxu0 0
        %924 = vmatprep.subr.bf16.mxu0 0
        %925 = vmatpush1.bf16.msra.mxu0 0
        %926 = vmatprep.subr.bf16.mxu0 0
        %927 = vmatpush1.bf16.msra.mxu0 0
        %928 = vmatprep.subr.bf16.mxu0 0
        %929 = vmatpush1.bf16.msra.mxu0 0
        %930 = vmatprep.mubr.bf16.mxu0 0
        %931 = vmatmul.mubr.bf16.gmra.mrb[0].mxu0 %v893
        %v932 = vpop.f32.mrb[0].mxu0
        %v933 = vadd.f32 0.0, %v932
        %v934 = vpop.f32.mrb[0].mxu0
        %v935 = vpop.f32.mrb[0].mxu0
        %v936 = vpop.f32.mrb[0].mxu0
        %937 = vdwg.mxu0
        %v938 = vpack.c.bf16 %v795, %v795
        %v939 = vpack.c.bf16 %v841, %v841
        %v940 = vpack.c.bf16 %v887, %v887
        %v941 = vpack.c.bf16 %v933, %v933
        %v942 = vld [vmem:[%s5] sm:$0xf]
        %s943 = scalar_lea.vmem %s5, 4
        %v944 = vld [vmem:[%s943] sm:$0xf]
        %v946 = vsel %vm520, %v939, 0
        %v949 = vsel %vm756, %v944, 0
        %951 = vmatprep.subr.bf16.mxu0 0
        %952 = vmatpush1.bf16.msra.mxu0 %v949
        %953 = vmatprep.subr.bf16.mxu0 0
        %954 = vmatpush1.bf16.msra.mxu0 0
        %955 = vmatprep.subr.bf16.mxu0 0
        %956 = vmatpush1.bf16.msra.mxu0 0
        %957 = vmatprep.subr.bf16.mxu0 0
        %958 = vmatpush1.bf16.msra.mxu0 0
        %959 = vmatprep.subr.bf16.mxu0 0
        %960 = vmatpush1.bf16.msra.mxu0 0
        %961 = vmatprep.subr.bf16.mxu0 0
        %962 = vmatpush1.bf16.msra.mxu0 0
        %963 = vmatprep.subr.bf16.mxu0 0
        %964 = vmatpush1.bf16.msra.mxu0 0
        %965 = vmatprep.subr.bf16.mxu0 0
        %966 = vmatpush1.bf16.msra.mxu0 0
        %967 = vmatprep.subr.bf16.mxu0 0
        %968 = vmatpush1.bf16.msra.mxu0 0
        %969 = vmatprep.subr.bf16.mxu0 0
        %970 = vmatpush1.bf16.msra.mxu0 0
        %971 = vmatprep.subr.bf16.mxu0 0
        %972 = vmatpush1.bf16.msra.mxu0 0
        %973 = vmatprep.subr.bf16.mxu0 0
        %974 = vmatpush1.bf16.msra.mxu0 0
        %975 = vmatprep.subr.bf16.mxu0 0
        %976 = vmatpush1.bf16.msra.mxu0 0
        %977 = vmatprep.subr.bf16.mxu0 0
        %978 = vmatpush1.bf16.msra.mxu0 0
        %979 = vmatprep.subr.bf16.mxu0 0
        %980 = vmatpush1.bf16.msra.mxu0 0
        %981 = vmatprep.subr.bf16.mxu0 0
        %982 = vmatpush1.bf16.msra.mxu0 0
        %983 = vmatprep.mubr.bf16.mxu0 0
        %984 = vmatmul.mubr.bf16.gmra.mrb[0].mxu0 %v946
        %v985 = vpop.f32.mrb[0].mxu0
        %v986 = vadd.f32 0.0, %v985
        %v987 = vpop.f32.mrb[0].mxu0
        %v988 = vpop.f32.mrb[0].mxu0
        %v989 = vpop.f32.mrb[0].mxu0
        %990 = vdwg.mxu0
        %v992 = vsel %vm520, %v938, 0
        %v995 = vsel %vm756, %v942, 0
        %997 = vmatprep.subr.bf16.mxu0 0
        %998 = vmatpush1.bf16.msra.mxu0 %v995
        %999 = vmatprep.subr.bf16.mxu0 0
        %1000 = vmatpush1.bf16.msra.mxu0 0
        %1001 = vmatprep.subr.bf16.mxu0 0
        %1002 = vmatpush1.bf16.msra.mxu0 0
        %1003 = vmatprep.subr.bf16.mxu0 0
        %1004 = vmatpush1.bf16.msra.mxu0 0
        %1005 = vmatprep.subr.bf16.mxu0 0
        %1006 = vmatpush1.bf16.msra.mxu0 0
        %1007 = vmatprep.subr.bf16.mxu0 0
        %1008 = vmatpush1.bf16.msra.mxu0 0
        %1009 = vmatprep.subr.bf16.mxu0 0
        %1010 = vmatpush1.bf16.msra.mxu0 0
        %1011 = vmatprep.subr.bf16.mxu0 0
        %1012 = vmatpush1.bf16.msra.mxu0 0
        %1013 = vmatprep.subr.bf16.mxu0 0
        %1014 = vmatpush1.bf16.msra.mxu0 0
        %1015 = vmatprep.subr.bf16.mxu0 0
        %1016 = vmatpush1.bf16.msra.mxu0 0
        %1017 = vmatprep.subr.bf16.mxu0 0
        %1018 = vmatpush1.bf16.msra.mxu0 0
        %1019 = vmatprep.subr.bf16.mxu0 0
        %1020 = vmatpush1.bf16.msra.mxu0 0
        %1021 = vmatprep.subr.bf16.mxu0 0
        %1022 = vmatpush1.bf16.msra.mxu0 0
        %1023 = vmatprep.subr.bf16.mxu0 0
        %1024 = vmatpush1.bf16.msra.mxu0 0
        %1025 = vmatprep.subr.bf16.mxu0 0
        %1026 = vmatpush1.bf16.msra.mxu0 0
        %1027 = vmatprep.subr.bf16.mxu0 0
        %1028 = vmatpush1.bf16.msra.mxu0 0
        %1029 = vmatprep.mubr.bf16.mxu0 0
        %1030 = vmatmul.mubr.bf16.gmra.mrb[0].mxu0 %v992
        %v1031 = vpop.f32.mrb[0].mxu0
        %v1032 = vadd.f32 %v986, %v1031
        %v1033 = vpop.f32.mrb[0].mxu0
        %v1034 = vpop.f32.mrb[0].mxu0
        %v1035 = vpop.f32.mrb[0].mxu0
        %1036 = vdwg.mxu0
        %s1037 = scalar_lea.vmem %s5, 8
        %v1038 = vld [vmem:[%s1037] sm:$0xf]
        %v1040 = vsel %vm520, %v940, 0
        %v1043 = vsel %vm756, %v1038, 0
        %1045 = vmatprep.subr.bf16.mxu0 0
        %1046 = vmatpush1.bf16.msra.mxu0 %v1043
        %1047 = vmatprep.subr.bf16.mxu0 0
        %1048 = vmatpush1.bf16.msra.mxu0 0
        %1049 = vmatprep.subr.bf16.mxu0 0
        %1050 = vmatpush1.bf16.msra.mxu0 0
        %1051 = vmatprep.subr.bf16.mxu0 0
        %1052 = vmatpush1.bf16.msra.mxu0 0
        %1053 = vmatprep.subr.bf16.mxu0 0
        %1054 = vmatpush1.bf16.msra.mxu0 0
        %1055 = vmatprep.subr.bf16.mxu0 0
        %1056 = vmatpush1.bf16.msra.mxu0 0
        %1057 = vmatprep.subr.bf16.mxu0 0
        %1058 = vmatpush1.bf16.msra.mxu0 0
        %1059 = vmatprep.subr.bf16.mxu0 0
        %1060 = vmatpush1.bf16.msra.mxu0 0
        %1061 = vmatprep.subr.bf16.mxu0 0
        %1062 = vmatpush1.bf16.msra.mxu0 0
        %1063 = vmatprep.subr.bf16.mxu0 0
        %1064 = vmatpush1.bf16.msra.mxu0 0
        %1065 = vmatprep.subr.bf16.mxu0 0
        %1066 = vmatpush1.bf16.msra.mxu0 0
        %1067 = vmatprep.subr.bf16.mxu0 0
        %1068 = vmatpush1.bf16.msra.mxu0 0
        %1069 = vmatprep.subr.bf16.mxu0 0
        %1070 = vmatpush1.bf16.msra.mxu0 0
        %1071 = vmatprep.subr.bf16.mxu0 0
        %1072 = vmatpush1.bf16.msra.mxu0 0
        %1073 = vmatprep.subr.bf16.mxu0 0
        %1074 = vmatpush1.bf16.msra.mxu0 0
        %1075 = vmatprep.subr.bf16.mxu0 0
        %1076 = vmatpush1.bf16.msra.mxu0 0
        %1077 = vmatprep.mubr.bf16.mxu0 0
        %1078 = vmatmul.mubr.bf16.gmra.mrb[0].mxu0 %v1040
        %v1079 = vpop.f32.mrb[0].mxu0
        %v1080 = vadd.f32 0.0, %v1079
        %v1081 = vpop.f32.mrb[0].mxu0
        %v1082 = vpop.f32.mrb[0].mxu0
        %v1083 = vpop.f32.mrb[0].mxu0
        %1084 = vdwg.mxu0
        %v1085 = vadd.f32 %v1032, %v1080
        %s1086 = scalar_lea.vmem %s5, 12
        %v1087 = vld [vmem:[%s1086] sm:$0xf]
        %v1089 = vsel %vm520, %v941, 0
        %v1092 = vsel %vm756, %v1087, 0
        %1094 = vmatprep.subr.bf16.mxu0 0
        %1095 = vmatpush1.bf16.msra.mxu0 %v1092
        %1096 = vmatprep.subr.bf16.mxu0 0
        %1097 = vmatpush1.bf16.msra.mxu0 0
        %1098 = vmatprep.subr.bf16.mxu0 0
        %1099 = vmatpush1.bf16.msra.mxu0 0
        %1100 = vmatprep.subr.bf16.mxu0 0
        %1101 = vmatpush1.bf16.msra.mxu0 0
        %1102 = vmatprep.subr.bf16.mxu0 0
        %1103 = vmatpush1.bf16.msra.mxu0 0
        %1104 = vmatprep.subr.bf16.mxu0 0
        %1105 = vmatpush1.bf16.msra.mxu0 0
        %1106 = vmatprep.subr.bf16.mxu0 0
        %1107 = vmatpush1.bf16.msra.mxu0 0
        %1108 = vmatprep.subr.bf16.mxu0 0
        %1109 = vmatpush1.bf16.msra.mxu0 0
        %1110 = vmatprep.subr.bf16.mxu0 0
        %1111 = vmatpush1.bf16.msra.mxu0 0
        %1112 = vmatprep.subr.bf16.mxu0 0
        %1113 = vmatpush1.bf16.msra.mxu0 0
        %1114 = vmatprep.subr.bf16.mxu0 0
        %1115 = vmatpush1.bf16.msra.mxu0 0
        %1116 = vmatprep.subr.bf16.mxu0 0
        %1117 = vmatpush1.bf16.msra.mxu0 0
        %1118 = vmatprep.subr.bf16.mxu0 0
        %1119 = vmatpush1.bf16.msra.mxu0 0
        %1120 = vmatprep.subr.bf16.mxu0 0
        %1121 = vmatpush1.bf16.msra.mxu0 0
        %1122 = vmatprep.subr.bf16.mxu0 0
        %1123 = vmatpush1.bf16.msra.mxu0 0
        %1124 = vmatprep.subr.bf16.mxu0 0
        %1125 = vmatpush1.bf16.msra.mxu0 0
        %1126 = vmatprep.mubr.bf16.mxu0 0
        %1127 = vmatmul.mubr.bf16.gmra.mrb[0].mxu0 %v1089
        %v1128 = vpop.f32.mrb[0].mxu0
        %v1129 = vadd.f32 0.0, %v1128
        %v1130 = vpop.f32.mrb[0].mxu0
        %v1131 = vpop.f32.mrb[0].mxu0
        %v1132 = vpop.f32.mrb[0].mxu0
        %1133 = vdwg.mxu0
        %v1134 = vadd.f32 %v1085, %v1129
        %v1135 = vld [vmem:[%s6] sm:$0x1]
        %v1137 = vlaneseq
        %v1138 = vshrl.u32 %v1137, 7
        %v1139 = vsub.s32 0, %v1138
        %v1140 = vrot.slane %v1135, %v1139
        %v1142 = vadd.f32 %v1134, %v1140
        %v1143 = vadd.f32 %v1142, %v500
        %vm1144 = vcmask 261120
        %v1145 = vsel %vm1144, %v1143, 0.0
        %1146 = vadd.xlane.f32.xlu0 %v1145
        %v1147 = vpop.xlane.xlu0 %1146
        %v1148 = vrcp.pop 32.0
        %v1149 = vmul.f32 %v1147, %v1148
        %v1150 = vsub.f32 %v1143, %v1149
        %v1151 = vmul.f32 %v1150, %v1150
        %v1152 = vsel %vm1144, %v1151, 0.0
        %1153 = vadd.xlane.f32.xlu0 %v1152
        %v1154 = vpop.xlane.xlu0 %1153
        %v1155 = vmul.f32 %v1154, %v1148
        %v1156 = vadd.f32 %v1155, 1e-12
        %v1157 = vrsqrt.pop %v1156
        %v1158 = vmul.f32 %v1150, %v1157
        %v1159 = vld [vmem:[%s7] sm:$0x1]
        %v1161 = vlaneseq
        %v1162 = vshrl.u32 %v1161, 7
        %v1163 = vsub.s32 0, %v1162
        %v1164 = vrot.slane %v1159, %v1163
        %v1166 = vmul.f32 %v1158, %v1164
        %v1167 = vld [vmem:[%s8] sm:$0x1]
        %v1169 = vlaneseq
        %v1170 = vshrl.u32 %v1169, 7
        %v1171 = vsub.s32 0, %v1170
        %v1172 = vrot.slane %v1167, %v1171
        %v1174 = vadd.f32 %v1166, %v1172
        %1175 = vst.msk [vmem:[%s495] sm:$0xff] %vm1144, %v1174
        %s1176 = sand.u32 %s272, 1
        %s1177 = scalar_lea.sflag [#allocation4], %s1176
        %s1178 = sand.u32 %s272, 1
        %s1179 = smul.addr %s1178, 8
        %s1180 = scalar_lea.vmem [#allocation10], %s1179
        // Predicated region
        $region73: #{tpu_custom_call.1} parent=55 // pred_check
          %p1181 = pneg %p282
        $region74: #{tpu_custom_call.1} parent=55 // pred_check_branch
          %1183 = sbr.rel (%p1181) target = $region76
        $region75: #{tpu_custom_call.1} parent=55 // pred_region
          %s1185 = ssub.s32 128, 128
          %1186 = vsyncadd %s1177, %s1185
          %s1187 = sadd.s32 %s37, %s36
          %s1188 = smul.addr %s1187, 128
          %s1189 = scalar_lea.hbm %s9, %s1188
          %s1191 = sshll.u32 %s1180, 4
          %s1192 = int_to_ptr.vmem [resolvable:$true] %s1191
          %1194 = dma.vmem_to_hbm [thread:$0]  %s1192, 128, %s1189, %s1177
        $region76: #{tpu_custom_call.1} parent=55 // pred_fallthru
          _
      $region56: #{tpu_custom_call.1} parent=5 // pred_fallthru
        _
      %p1195 = scmp.le.s32.totalorder 2, %s27
      // Predicated region
      $region77: #{tpu_custom_call.1} parent=5 // pred_check
        %p1196 = pneg %p1195
      $region78: #{tpu_custom_call.1} parent=5 // pred_check_branch
        %1198 = sbr.rel (%p1196) target = $region80
      $region79: #{tpu_custom_call.1} parent=5 // pred_region
        %s1199 = ssub.s32 %s27, 2
        // Predicated region
        $region81: #{tpu_custom_call.1} parent=79 // pred_check
          %p1200 = pneg %p288
        $region82: #{tpu_custom_call.1} parent=79 // pred_check_branch
          %1202 = sbr.rel (%p1200) target = $region84
        $region83: #{tpu_custom_call.1} parent=79 // pred_region
          %s1203 = sand.u32 %s273, 1
          %s1204 = scalar_lea.sflag [#allocation4], %s1203
          %s1205 = sand.u32 %s273, 1
          %s1206 = smul.addr %s1205, 8
          %s1207 = scalar_lea.vmem [#allocation10], %s1206
          %1208 = dma.done %s1204, 128
        $region84: #{tpu_custom_call.1} parent=79 // pred_fallthru
          _
      $region80: #{tpu_custom_call.1} parent=5 // pred_fallthru
        _
    $region6: #{tpu_custom_call.1} parent=1 // loop_footer
      %s31 = sadd.s32 1, %s27
    $region7: #{tpu_custom_call.1} parent=1 // loop_footer_branch
      %26 = sbr.rel target = $region3
    $region8: #{tpu_custom_call.1} parent=1 // loop_exit
      _
    %1209 = vsyncpa [#allocation3], 1
    %s1210 = scalar_lea.sflag [#allocation3], 1
    %1211 = vsyncpa %s1210, 1
    %1212 = vsyncpa [#allocation6], 1
    %s1213 = scalar_lea.sflag [#allocation6], 1
    %1214 = vsyncpa %s1213, 1
    %1215 = vsyncpa [#allocation9], 1
    %s1216 = scalar_lea.sflag [#allocation9], 1
    %1217 = vsyncpa %s1216, 1
    %1218 = vsyncpa [#allocation4], 1
    %s1219 = scalar_lea.sflag [#allocation4], 1
    %1220 = vsyncpa %s1219, 1

// kernel: tpu_custom_call.1
$region0: #{tpu_custom_call.1}
  #allocation0 [shape = 'u32[]', space=smem, size = 0x4, offset = 0x4, fixed_abs, tag = 'smem constant byte address 0x4 - core index']
  #allocation1 [shape = 'u32[144,128]{1,0:T(1,128)}', space=vmem, size = 0x12000, scoped, tag = 'internal scratch']
  %s0 = inlined_call_operand.hbm [shape: f32[2,8,32], index: 0, kind: input, shape index: {}]
  %s1 = inlined_call_operand.vmem [shape: f32[2,1,1,8], index: 1, kind: input, shape index: {}]
  %s2 = inlined_call_operand.hbm [shape: bf16[2,4,8,8], index: 2, kind: input, shape index: {}]
  %s3 = inlined_call_operand.hbm [shape: bf16[2,4,8,8], index: 3, kind: input, shape index: {}]
  %s4 = inlined_call_operand.hbm [shape: bf16[2,4,8,8], index: 4, kind: input, shape index: {}]
  %s5 = inlined_call_operand.vmem [shape: bf16[4,8,32], index: 5, kind: input, shape index: {}]
  %s6 = inlined_call_operand.vmem [shape: f32[1,32], index: 6, kind: input, shape index: {}]
  %s7 = inlined_call_operand.vmem [shape: f32[1,32], index: 7, kind: input, shape index: {}]
  %s8 = inlined_call_operand.vmem [shape: f32[1,32], index: 8, kind: input, shape index: {}]
  %s9 = inlined_call_operand.hbm [shape: f32[2,8,32], index: 9, kind: output, shape index: {}]
  %s10 = sld [smem:[#allocation0]]
  $region85: #{tpu_custom_call.1} parent=0
    _
  %s12 = ssub.s32 1, %s10
  %s13 = scalar_select 0, %s12, %s10
  $region1: #{tpu_custom_call.1} parent=0
    #allocation2 [shape = 'u8[8192]{0}', space=vmem, size = 0x2000, scoped, tag = 'input window, operand 0']
    #allocation3 [shape = 's32[2]{0}', space=sflag, size = 0x8, scoped, tag = 'scoped memory for tpu_custom_call.1']
    #allocation4 [shape = 's32[2]{0}', space=sflag, size = 0x8, scoped, tag = 'scoped memory for tpu_custom_call.1']
    #allocation5 [shape = 'u8[16384]{0}', space=vmem, size = 0x4000, scoped, tag = 'input window, operand 2']
    #allocation6 [shape = 's32[2]{0}', space=sflag, size = 0x8, scoped, tag = 'scoped memory for tpu_custom_call.1']
    #allocation7 [shape = 'u8[16384]{0}', space=vmem, size = 0x4000, scoped, tag = 'input window, operand 3']
    #allocation8 [shape = 'u8[16384]{0}', space=vmem, size = 0x4000, scoped, tag = 'input window, operand 4']
    #allocation9 [shape = 's32[2]{0}', space=sflag, size = 0x8, scoped, tag = 'scoped memory for tpu_custom_call.1']
    #allocation10 [shape = 'u8[8192]{0}', space=vmem, size = 0x2000, scoped, tag = 'output window, operand 0']
    %14 = vsyncpa [#allocation3], 0
    %s15 = scalar_lea.sflag [#allocation3], 1
    %16 = vsyncpa %s15, 0
    %17 = vsyncpa [#allocation6], 0
    %s18 = scalar_lea.sflag [#allocation6], 1
    %19 = vsyncpa %s18, 0
    %20 = vsyncpa [#allocation9], 0
    %s21 = scalar_lea.sflag [#allocation9], 1
    %22 = vsyncpa %s21, 0
    %23 = vsyncpa [#allocation4], 0
    %s24 = scalar_lea.sflag [#allocation4], 1
    %25 = vsyncpa %s24, 0
    loop: start=0, step=1, limit=4
    $region2: #{tpu_custom_call.1} parent=1 // loop_pre_header
      _
    $region3: #{tpu_custom_call.1} parent=1 // loop_header
      %s27 = sphi 0, %s31
      %p28 = scmp.ge.s32.totalorder %s27, 4
      %s34 = sphi 0, %s46
      %s35 = sphi 0, %s42
      %s36 = sphi 0, %s34
      %s37 = sphi 0, %s35
      %s38 = sphi 0, %s36
      %s39 = sphi 0, %s37
      %s51 = sphi 0, %s53
      %s54 = sphi 0, %s51
      %s55 = sphi 0, %s54
      %s71 = sphi 0, %s55
      %s77 = sphi 0, %s79
      %s80 = sphi 0, %s77
      %s81 = sphi 0, %s80
      %s97 = sphi 0, %s81
      %s105 = sphi 0, %s107
      %s108 = sphi 0, %s105
      %s109 = sphi 0, %s108
      %s125 = sphi 0, %s109
      %s131 = sphi 0, %s133
      %s134 = sphi 0, %s131
      %s135 = sphi 0, %s134
      %s151 = sphi 0, %s135
      %s157 = sphi 0, %s159
      %s160 = sphi 0, %s157
      %s161 = sphi 0, %s160
      %s177 = sphi 0, %s161
      %s181 = sphi 0, %s181
      %s183 = sphi 0, %s181
      %s184 = sphi 0, %s183
      %s198 = sphi 0, %s184
      %s202 = sphi 0, %s202
      %s204 = sphi 0, %s202
      %s205 = sphi 0, %s204
      %s219 = sphi 0, %s205
      %s223 = sphi 0, %s223
      %s225 = sphi 0, %s223
      %s226 = sphi 0, %s225
      %s240 = sphi 0, %s226
      %s244 = sphi 0, %s244
      %s246 = sphi 0, %s244
      %s247 = sphi 0, %s246
      %s261 = sphi 0, %s247
      %s269 = sphi 0, %s271
      %s272 = sphi 0, %s269
      %s273 = sphi 0, %s272
      %s289 = sphi 0, %s273
    $region4: #{tpu_custom_call.1} parent=1 // loop_header_branch
      %30 = sbr.rel (%p28) target = $region8
    $region5: #{tpu_custom_call.1} parent=1 // loop_body
      %s32 = ssub.s32 %s27, 1
      %s33 = ssub.s32 %s27, 2
      %s40 = sadd.s32 1, %s35
      %p41 = scmp.ge.s32.totalorder %s40, 1
      %s42 = scalar_select %p41, 0, %s40
      %s43 = sadd.s32 1, %s34
      %s44 = scalar_select %p41, %s43, %s34
      %p45 = scmp.ge.s32.totalorder %s44, 2
      %s46 = scalar_select %p45, 0, %s44
      %s47 = ssub.s32 %s34, %s46
      %s48 = ssub.s32 %s35, %s42
      %s49 = sor.u32 %s47, %s48
      %p50 = scmp.eq.s32.totalorder %s49, 0
      %s52 = sadd.s32 %s51, 1
      %s53 = scalar_select %p50, %s51, %s52
      %p56 = pneg %p50
      %p57 = scmp.eq.s32.totalorder %s27, 1
      %p58 = por %p56, %p57
      %p59 = scmp.ne.s32.totalorder %s51, %s54
      %p60 = scmp.eq.s32.totalorder %s27, 0
      %p61 = por %p59, %p60
      %p62 = scmp.ne.s32.totalorder %s51, %s54
      %p63 = scmp.eq.s32.totalorder %s32, 1
      %p64 = por %p62, %p63
      %p65 = scmp.ne.s32.totalorder %s54, %s55
      %p66 = scmp.eq.s32.totalorder %s32, 0
      %p67 = por %p65, %p66
      %p68 = scmp.ne.s32.totalorder %s54, %s55
      %p69 = scmp.eq.s32.totalorder %s33, 1
      %p70 = por %p68, %p69
      %p72 = scmp.ne.s32.totalorder %s55, %s71
      %p73 = scmp.eq.s32.totalorder %s33, 0
      %p74 = por %p72, %p73
      %s75 = ssub.s32 %s34, %s46
      %p76 = scmp.eq.s32.totalorder %s75, 0
      %s78 = sadd.s32 %s77, 1
      %s79 = scalar_select %p76, %s77, %s78
      %p82 = pneg %p76
      %p83 = scmp.eq.s32.totalorder %s27, 1
      %p84 = por %p82, %p83
      %p85 = scmp.ne.s32.totalorder %s77, %s80
      %p86 = scmp.eq.s32.totalorder %s27, 0
      %p87 = por %p85, %p86
      %p88 = scmp.ne.s32.totalorder %s77, %s80
      %p89 = scmp.eq.s32.totalorder %s32, 1
      %p90 = por %p88, %p89
      %p91 = scmp.ne.s32.totalorder %s80, %s81
      %p92 = scmp.eq.s32.totalorder %s32, 0
      %p93 = por %p91, %p92
      %p94 = scmp.ne.s32.totalorder %s80, %s81
      %p95 = scmp.eq.s32.totalorder %s33, 1
      %p96 = por %p94, %p95
      %p98 = scmp.ne.s32.totalorder %s81, %s97
      %p99 = scmp.eq.s32.totalorder %s33, 0
      %p100 = por %p98, %p99
      %s101 = ssub.s32 %s34, %s46
      %s102 = ssub.s32 %s35, %s42
      %s103 = sor.u32 %s101, %s102
      %p104 = scmp.eq.s32.totalorder %s103, 0
      %s106 = sadd.s32 %s105, 1
      %s107 = scalar_select %p104, %s105, %s106
      %p110 = pneg %p104
      %p111 = scmp.eq.s32.totalorder %s27, 1
      %p112 = por %p110, %p111
      %p113 = scmp.ne.s32.totalorder %s105, %s108
      %p114 = scmp.eq.s32.totalorder %s27, 0
      %p115 = por %p113, %p114
      %p116 = scmp.ne.s32.totalorder %s105, %s108
      %p117 = scmp.eq.s32.totalorder %s32, 1
      %p118 = por %p116, %p117
      %p119 = scmp.ne.s32.totalorder %s108, %s109
      %p120 = scmp.eq.s32.totalorder %s32, 0
      %p121 = por %p119, %p120
      %p122 = scmp.ne.s32.totalorder %s108, %s109
      %p123 = scmp.eq.s32.totalorder %s33, 1
      %p124 = por %p122, %p123
      %p126 = scmp.ne.s32.totalorder %s109, %s125
      %p127 = scmp.eq.s32.totalorder %s33, 0
      %p128 = por %p126, %p127
      %s129 = ssub.s32 %s34, %s46
      %p130 = scmp.eq.s32.totalorder %s129, 0
      %s132 = sadd.s32 %s131, 1
      %s133 = scalar_select %p130, %s131, %s132
      %p136 = pneg %p130
      %p137 = scmp.eq.s32.totalorder %s27, 1
      %p138 = por %p136, %p137
      %p139 = scmp.ne.s32.totalorder %s131, %s134
      %p140 = scmp.eq.s32.totalorder %s27, 0
      %p141 = por %p139, %p140
      %p142 = scmp.ne.s32.totalorder %s131, %s134
      %p143 = scmp.eq.s32.totalorder %s32, 1
      %p144 = por %p142, %p143
      %p145 = scmp.ne.s32.totalorder %s134, %s135
      %p146 = scmp.eq.s32.totalorder %s32, 0
      %p147 = por %p145, %p146
      %p148 = scmp.ne.s32.totalorder %s134, %s135
      %p149 = scmp.eq.s32.totalorder %s33, 1
      %p150 = por %p148, %p149
      %p152 = scmp.ne.s32.totalorder %s135, %s151
      %p153 = scmp.eq.s32.totalorder %s33, 0
      %p154 = por %p152, %p153
      %s155 = ssub.s32 %s34, %s46
      %p156 = scmp.eq.s32.totalorder %s155, 0
      %s158 = sadd.s32 %s157, 1
      %s159 = scalar_select %p156, %s157, %s158
      %p162 = pneg %p156
      %p163 = scmp.eq.s32.totalorder %s27, 1
      %p164 = por %p162, %p163
      %p165 = scmp.ne.s32.totalorder %s157, %s160
      %p166 = scmp.eq.s32.totalorder %s27, 0
      %p167 = por %p165, %p166
      %p168 = scmp.ne.s32.totalorder %s157, %s160
      %p169 = scmp.eq.s32.totalorder %s32, 1
      %p170 = por %p168, %p169
      %p171 = scmp.ne.s32.totalorder %s160, %s161
      %p172 = scmp.eq.s32.totalorder %s32, 0
      %p173 = por %p171, %p172
      %p174 = scmp.ne.s32.totalorder %s160, %s161
      %p175 = scmp.eq.s32.totalorder %s33, 1
      %p176 = por %p174, %p175
      %p178 = scmp.ne.s32.totalorder %s161, %s177
      %p179 = scmp.eq.s32.totalorder %s33, 0
      %p180 = por %p178, %p179
      %s182 = sadd.s32 %s181, 1
      %p185 = scmp.eq.s32.totalorder %s27, 1
      %p186 = scmp.ne.s32.totalorder %s181, %s183
      %p187 = scmp.eq.s32.totalorder %s27, 0
      %p188 = por %p186, %p187
      %p189 = scmp.ne.s32.totalorder %s181, %s183
      %p190 = scmp.eq.s32.totalorder %s32, 1
      %p191 = por %p189, %p190
      %p192 = scmp.ne.s32.totalorder %s183, %s184
      %p193 = scmp.eq.s32.totalorder %s32, 0
      %p194 = por %p192, %p193
      %p195 = scmp.ne.s32.totalorder %s183, %s184
      %p196 = scmp.eq.s32.totalorder %s33, 1
      %p197 = por %p195, %p196
      %p199 = scmp.ne.s32.totalorder %s184, %s198
      %p200 = scmp.eq.s32.totalorder %s33, 0
      %p201 = por %p199, %p200
      %s203 = sadd.s32 %s202, 1
      %p206 = scmp.eq.s32.totalorder %s27, 1
      %p207 = scmp.ne.s32.totalorder %s202, %s204
      %p208 = scmp.eq.s32.totalorder %s27, 0
      %p209 = por %p207, %p208
      %p210 = scmp.ne.s32.totalorder %s202, %s204
      %p211 = scmp.eq.s32.totalorder %s32, 1
      %p212 = por %p210, %p211
      %p213 = scmp.ne.s32.totalorder %s204, %s205
      %p214 = scmp.eq.s32.totalorder %s32, 0
      %p215 = por %p213, %p214
      %p216 = scmp.ne.s32.totalorder %s204, %s205
      %p217 = scmp.eq.s32.totalorder %s33, 1
      %p218 = por %p216, %p217
      %p220 = scmp.ne.s32.totalorder %s205, %s219
      %p221 = scmp.eq.s32.totalorder %s33, 0
      %p222 = por %p220, %p221
      %s224 = sadd.s32 %s223, 1
      %p227 = scmp.eq.s32.totalorder %s27, 1
      %p228 = scmp.ne.s32.totalorder %s223, %s225
      %p229 = scmp.eq.s32.totalorder %s27, 0
      %p230 = por %p228, %p229
      %p231 = scmp.ne.s32.totalorder %s223, %s225
      %p232 = scmp.eq.s32.totalorder %s32, 1
      %p233 = por %p231, %p232
      %p234 = scmp.ne.s32.totalorder %s225, %s226
      %p235 = scmp.eq.s32.totalorder %s32, 0
      %p236 = por %p234, %p235
      %p237 = scmp.ne.s32.totalorder %s225, %s226
      %p238 = scmp.eq.s32.totalorder %s33, 1
      %p239 = por %p237, %p238
      %p241 = scmp.ne.s32.totalorder %s226, %s240
      %p242 = scmp.eq.s32.totalorder %s33, 0
      %p243 = por %p241, %p242
      %s245 = sadd.s32 %s244, 1
      %p248 = scmp.eq.s32.totalorder %s27, 1
      %p249 = scmp.ne.s32.totalorder %s244, %s246
      %p250 = scmp.eq.s32.totalorder %s27, 0
      %p251 = por %p249, %p250
      %p252 = scmp.ne.s32.totalorder %s244, %s246
      %p253 = scmp.eq.s32.totalorder %s32, 1
      %p254 = por %p252, %p253
      %p255 = scmp.ne.s32.totalorder %s246, %s247
      %p256 = scmp.eq.s32.totalorder %s32, 0
      %p257 = por %p255, %p256
      %p258 = scmp.ne.s32.totalorder %s246, %s247
      %p259 = scmp.eq.s32.totalorder %s33, 1
      %p260 = por %p258, %p259
      %p262 = scmp.ne.s32.totalorder %s247, %s261
      %p263 = scmp.eq.s32.totalorder %s33, 0
      %p264 = por %p262, %p263
      %s265 = ssub.s32 %s34, %s46
      %s266 = ssub.s32 %s35, %s42
      %s267 = sor.u32 %s265, %s266
      %p268 = scmp.eq.s32.totalorder %s267, 0
      %s270 = sadd.s32 %s269, 1
      %s271 = scalar_select %p268, %s269, %s270
      %p274 = pneg %p268
      %p275 = scmp.eq.s32.totalorder %s27, 1
      %p276 = por %p274, %p275
      %p277 = scmp.ne.s32.totalorder %s269, %s272
      %p278 = scmp.eq.s32.totalorder %s27, 0
      %p279 = por %p277, %p278
      %p280 = scmp.ne.s32.totalorder %s269, %s272
      %p281 = scmp.eq.s32.totalorder %s32, 1
      %p282 = por %p280, %p281
      %p283 = scmp.ne.s32.totalorder %s272, %s273
      %p284 = scmp.eq.s32.totalorder %s32, 0
      %p285 = por %p283, %p284
      %p286 = scmp.ne.s32.totalorder %s272, %s273
      %p287 = scmp.eq.s32.totalorder %s33, 1
      %p288 = por %p286, %p287
      %p290 = scmp.ne.s32.totalorder %s273, %s289
      %p291 = scmp.eq.s32.totalorder %s33, 0
      %p292 = por %p290, %p291
      %p293 = scmp.le.s32.totalorder 1, %s27
      %p294 = scmp.lt.s32.totalorder %s27, 3
      %p295 = pnand %p293, %p294
      %p296 = pneg %p295
      // Predicated region
      $region9: #{tpu_custom_call.1} parent=5 // pred_check
        _
      $region10: #{tpu_custom_call.1} parent=5 // pred_check_branch
        %298 = sbr.rel (%p295) target = $region12
      $region11: #{tpu_custom_call.1} parent=5 // pred_region
        %s299 = ssub.s32 %s27, 1
        // Predicated region
        $region13: #{tpu_custom_call.1} parent=11 // pred_check
          %p300 = pneg %p194
        $region14: #{tpu_custom_call.1} parent=11 // pred_check_branch
          %302 = sbr.rel (%p300) target = $region16
        $region15: #{tpu_custom_call.1} parent=11 // pred_region
          _
        $region16: #{tpu_custom_call.1} parent=11 // pred_fallthru
          _
        // Predicated region
        $region17: #{tpu_custom_call.1} parent=11 // pred_check
          %p303 = pneg %p215
        $region18: #{tpu_custom_call.1} parent=11 // pred_check_branch
          %305 = sbr.rel (%p303) target = $region20
        $region19: #{tpu_custom_call.1} parent=11 // pred_region
          _
        $region20: #{tpu_custom_call.1} parent=11 // pred_fallthru
          _
        // Predicated region
        $region21: #{tpu_custom_call.1} parent=11 // pred_check
          %p306 = pneg %p236
        $region22: #{tpu_custom_call.1} parent=11 // pred_check_branch
          %308 = sbr.rel (%p306) target = $region24
        $region23: #{tpu_custom_call.1} parent=11 // pred_region
          _
        $region24: #{tpu_custom_call.1} parent=11 // pred_fallthru
          _
        // Predicated region
        $region25: #{tpu_custom_call.1} parent=11 // pred_check
          %p309 = pneg %p257
        $region26: #{tpu_custom_call.1} parent=11 // pred_check_branch
          %311 = sbr.rel (%p309) target = $region28
        $region27: #{tpu_custom_call.1} parent=11 // pred_region
          _
        $region28: #{tpu_custom_call.1} parent=11 // pred_fallthru
          _
      $region12: #{tpu_custom_call.1} parent=5 // pred_fallthru
        _
      %p312 = scmp.lt.s32.totalorder %s27, 2
      // Predicated region
      $region29: #{tpu_custom_call.1} parent=5 // pred_check
        %p313 = pneg %p312
      $region30: #{tpu_custom_call.1} parent=5 // pred_check_branch
        %315 = sbr.rel (%p313) target = $region32
      $region31: #{tpu_custom_call.1} parent=5 // pred_region
        // Predicated region
        $region33: #{tpu_custom_call.1} parent=31 // pred_check
          %p316 = pneg %p61
        $region34: #{tpu_custom_call.1} parent=31 // pred_check_branch
          %318 = sbr.rel (%p316) target = $region36
        $region35: #{tpu_custom_call.1} parent=31 // pred_region
          %s319 = sand.u32 %s51, 1
          %s320 = scalar_lea.sflag [#allocation3], %s319
          %s321 = sand.u32 %s51, 1
          %s322 = smul.addr %s321, 8
          %s323 = scalar_lea.vmem [#allocation2], %s322
          %s325 = ssub.s32 128, 128
          %326 = vsyncadd %s320, %s325
          %s327 = sadd.s32 %s35, %s34
          %s328 = smul.addr %s327, 128
          %s329 = scalar_lea.hbm %s0, %s328
          %s331 = sshll.u32 %s323, 4
          %s332 = int_to_ptr.vmem [resolvable:$true] %s331
          %334 = dma.hbm_to_vmem [thread:$0]  %s329, 128, %s332, %s320
        $region36: #{tpu_custom_call.1} parent=31 // pred_fallthru
          _
        // Predicated region
        $region37: #{tpu_custom_call.1} parent=31 // pred_check
          %p335 = pneg %p87
        $region38: #{tpu_custom_call.1} parent=31 // pred_check_branch
          %337 = sbr.rel (%p335) target = $region40
        $region39: #{tpu_custom_call.1} parent=31 // pred_region
          %p338 = scmp.lt.s32.totalorder %s34, 1
          %s339 = scalar_select %p338, %s34, 1
          %s340 = scalar_lea.vmem %s1, %s339
        $region40: #{tpu_custom_call.1} parent=31 // pred_fallthru
          _
        // Predicated region
        $region41: #{tpu_custom_call.1} parent=31 // pred_check
          %p341 = pneg %p115
        $region42: #{tpu_custom_call.1} parent=31 // pred_check_branch
          %343 = sbr.rel (%p341) target = $region44
        $region43: #{tpu_custom_call.1} parent=31 // pred_region
          %s344 = sand.u32 %s27, 1
          %s345 = scalar_lea.sflag [#allocation6], %s344
          %s346 = sand.u32 %s105, 1
          %s347 = smul.addr %s346, 16
          %s348 = scalar_lea.vmem [#allocation5], %s347
          %s350 = ssub.s32 256, 256
          %351 = vsyncadd %s345, %s350
          %s352 = smul.addr %s34, 4
          %s353 = sadd.s32 %s35, %s352
          %s354 = smul.addr %s353, 64
          %s355 = scalar_lea.hbm %s2, %s354
          %s356 = sshll.u32 %s348, 4
          %s357 = int_to_ptr.vmem [resolvable:$true] %s356
          %362 = dma.hbm_to_vmem [thread:$0]  %s355, 256, %s357, %s345, 64, 64, 4
        $region44: #{tpu_custom_call.1} parent=31 // pred_fallthru
          _
        // Predicated region
        $region45: #{tpu_custom_call.1} parent=31 // pred_check
          %p363 = pneg %p141
        $region46: #{tpu_custom_call.1} parent=31 // pred_check_branch
          %365 = sbr.rel (%p363) target = $region48
        $region47: #{tpu_custom_call.1} parent=31 // pred_region
          %s366 = sand.u32 %s27, 1
          %s367 = scalar_lea.sflag [#allocation6], %s366
          %s368 = sand.u32 %s131, 1
          %s369 = smul.addr %s368, 16
          %s370 = scalar_lea.vmem [#allocation7], %s369
          %s372 = ssub.s32 256, 256
          %373 = vsyncadd %s367, %s372
          %s374 = smul.addr %s34, 4
          %s375 = smul.addr %s374, 64
          %s376 = scalar_lea.hbm %s3, %s375
          %s377 = sshll.u32 %s370, 4
          %s378 = int_to_ptr.vmem [resolvable:$true] %s377
          %383 = dma.hbm_to_vmem [thread:$0]  %s376, 256, %s378, %s367, 64, 64, 4
        $region48: #{tpu_custom_call.1} parent=31 // pred_fallthru
          _
        // Predicated region
        $region49: #{tpu_custom_call.1} parent=31 // pred_check
          %p384 = pneg %p167
        $region50: #{tpu_custom_call.1} parent=31 // pred_check_branch
          %386 = sbr.rel (%p384) target = $region52
        $region51: #{tpu_custom_call.1} parent=31 // pred_region
          %s387 = sand.u32 %s157, 1
          %s388 = scalar_lea.sflag [#allocation9], %s387
          %s389 = sand.u32 %s157, 1
          %s390 = smul.addr %s389, 16
          %s391 = scalar_lea.vmem [#allocation8], %s390
          %s393 = ssub.s32 256, 256
          %394 = vsyncadd %s388, %s393
          %s395 = smul.addr %s34, 4
          %s396 = smul.addr %s395, 64
          %s397 = scalar_lea.hbm %s4, %s396
          %s398 = sshll.u32 %s391, 4
          %s399 = int_to_ptr.vmem [resolvable:$true] %s398
          %404 = dma.hbm_to_vmem [thread:$0]  %s397, 256, %s399, %s388, 64, 64, 4
        $region52: #{tpu_custom_call.1} parent=31 // pred_fallthru
          _
      $region32: #{tpu_custom_call.1} parent=5 // pred_fallthru
        _
      %p405 = scmp.le.s32.totalorder 1, %s27
      %p406 = scmp.lt.s32.totalorder %s27, 3
      %p407 = pnand %p405, %p406
      %p408 = pneg %p407
      // Predicated region
      $region53: #{tpu_custom_call.1} parent=5 // pred_check
        _
      $region54: #{tpu_custom_call.1} parent=5 // pred_check_branch
        %410 = sbr.rel (%p407) target = $region56
      $region55: #{tpu_custom_call.1} parent=5 // pred_region
        %s411 = ssub.s32 %s27, 1
        %s412 = sand.u32 %s54, 1
        %s413 = scalar_lea.sflag [#allocation3], %s412
        %s414 = sand.u32 %s54, 1
        %s415 = smul.addr %s414, 8
        %s416 = scalar_lea.vmem [#allocation2], %s415
        // Predicated region
        $region57: #{tpu_custom_call.1} parent=55 // pred_check
          %p417 = pneg %p67
        $region58: #{tpu_custom_call.1} parent=55 // pred_check_branch
          %419 = sbr.rel (%p417) target = $region60
        $region59: #{tpu_custom_call.1} parent=55 // pred_region
          %420 = dma.done %s413, 128
        $region60: #{tpu_custom_call.1} parent=55 // pred_fallthru
          _
        %s421 = sand.u32 %s32, 1
        %s422 = scalar_lea.sflag [#allocation6], %s421
        %s423 = sand.u32 %s108, 1
        %s424 = smul.addr %s423, 16
        %s425 = scalar_lea.vmem [#allocation5], %s424
        // Predicated region
        $region61: #{tpu_custom_call.1} parent=55 // pred_check
          %p426 = pneg %p121
        $region62: #{tpu_custom_call.1} parent=55 // pred_check_branch
          %428 = sbr.rel (%p426) target = $region64
        $region63: #{tpu_custom_call.1} parent=55 // pred_region
          %429 = dma.done %s422, 256
        $region64: #{tpu_custom_call.1} parent=55 // pred_fallthru
          _
        %s430 = sand.u32 %s32, 1
        %s431 = scalar_lea.sflag [#allocation6], %s430
        %s432 = sand.u32 %s134, 1
        %s433 = smul.addr %s432, 16
        %s434 = scalar_lea.vmem [#allocation7], %s433
        // Predicated region
        $region65: #{tpu_custom_call.1} parent=55 // pred_check
          %p435 = pneg %p147
        $region66: #{tpu_custom_call.1} parent=55 // pred_check_branch
          %437 = sbr.rel (%p435) target = $region68
        $region67: #{tpu_custom_call.1} parent=55 // pred_region
          %438 = dma.done %s431, 256
        $region68: #{tpu_custom_call.1} parent=55 // pred_fallthru
          _
        %s439 = sand.u32 %s160, 1
        %s440 = scalar_lea.sflag [#allocation9], %s439
        %s441 = sand.u32 %s160, 1
        %s442 = smul.addr %s441, 16
        %s443 = scalar_lea.vmem [#allocation8], %s442
        // Predicated region
        $region69: #{tpu_custom_call.1} parent=55 // pred_check
          %p444 = pneg %p173
        $region70: #{tpu_custom_call.1} parent=55 // pred_check_branch
          %446 = sbr.rel (%p444) target = $region72
        $region71: #{tpu_custom_call.1} parent=55 // pred_region
          %447 = dma.done %s440, 256
        $region72: #{tpu_custom_call.1} parent=55 // pred_fallthru
          _
        %s448 = sand.u32 %s54, 1
        %s449 = scalar_lea.sflag [#allocation3], %s448
        %s450 = sand.u32 %s54, 1
        %s451 = smul.addr %s450, 8
        %s452 = scalar_lea.vmem [#allocation2], %s451
        %p453 = pneg %p67
        %p454 = pneg %p64
        %p455 = scmp.lt.s32.totalorder %s36, 1
        %s456 = scalar_select %p455, %s36, 1
        %s457 = scalar_lea.vmem %s1, %s456
        %p458 = pneg %p93
        %p459 = pneg %p90
        %s460 = sand.u32 %s32, 1
        %s461 = scalar_lea.sflag [#allocation6], %s460
        %s462 = sand.u32 %s108, 1
        %s463 = smul.addr %s462, 16
        %s464 = scalar_lea.vmem [#allocation5], %s463
        %p465 = pneg %p121
        %p466 = pneg %p118
        %s467 = sand.u32 %s32, 1
        %s468 = scalar_lea.sflag [#allocation6], %s467
        %s469 = sand.u32 %s134, 1
        %s470 = smul.addr %s469, 16
        %s471 = scalar_lea.vmem [#allocation7], %s470
        %p472 = pneg %p147
        %p473 = pneg %p144
        %s474 = sand.u32 %s160, 1
        %s475 = scalar_lea.sflag [#allocation9], %s474
        %s476 = sand.u32 %s160, 1
        %s477 = smul.addr %s476, 16
        %s478 = scalar_lea.vmem [#allocation8], %s477
        %p479 = pneg %p173
        %p480 = pneg %p170
        %p481 = pneg %p194
        %p482 = pneg %p191
        %p483 = pneg %p215
        %p484 = pneg %p212
        %p485 = pneg %p236
        %p486 = pneg %p233
        %p487 = pneg %p257
        %p488 = pneg %p254
        %p489 = pneg %p285
        %p490 = pneg %p282
        %s491 = sand.u32 %s272, 1
        %s492 = scalar_lea.sflag [#allocation4], %s491
        %s493 = sand.u32 %s272, 1
        %s494 = smul.addr %s493, 8
        %s495 = scalar_lea.vmem [#allocation10], %s494
        %p496 = scmp.lt.s32.totalorder %s36, 1
        %s497 = scalar_select %p496, %s36, 1
        %s498 = scalar_lea.vmem %s1, %s497
        %v500 = vld [vmem:[%s416] sm:$0xff]
        %v501 = vld [vmem:[%s425] sm:$0xf]
        %v502 = vld [vmem:[%s425 + $0x4] sm:$0xf]
        %v503 = vld [vmem:[%s425 + $0x8] sm:$0xf]
        %v504 = vld [vmem:[%s425 + $0xc] sm:$0xf]
        %v505 = vld [vmem:[%s434] sm:$0xf]
        %v506 = vld [vmem:[%s434 + $0x4] sm:$0xf]
        %v507 = vld [vmem:[%s434 + $0x8] sm:$0xf]
        %v508 = vld [vmem:[%s434 + $0xc] sm:$0xf]
        %v509 = vld [vmem:[%s443] sm:$0xf]
        %v510 = vld [vmem:[%s443 + $0x4] sm:$0xf]
        %v511 = vld [vmem:[%s443 + $0x8] sm:$0xf]
        %v512 = vld [vmem:[%s443 + $0xc] sm:$0xf]
        %v513 = vld [vmem:[%s498] sm:$0x1]
        %v515 = vlaneseq
        %v516 = vshrl.u32 %v515, 7
        %v517 = vsub.s32 0, %v516
        %v518 = vrot.slane %v513, %v517
        %vm520 = vcmask 64512
        %v522 = vsel %vm520, %v501, 0
        %v525 = vsel %vm520, %v505, 0
        %527 = vmatprep.subr.bf16.mxu0 0
        %528 = vmatpush1.bf16.xpose.msra.mxu0 %v525
        %529 = vmatprep.subr.bf16.mxu0 0
        %530 = vmatpush1.bf16.xpose.msra.mxu0 0
        %531 = vmatprep.subr.bf16.mxu0 0
        %532 = vmatpush1.bf16.xpose.msra.mxu0 0
        %533 = vmatprep.subr.bf16.mxu0 0
        %534 = vmatpush1.bf16.xpose.msra.mxu0 0
        %535 = vmatprep.subr.bf16.mxu0 0
        %536 = vmatpush1.bf16.xpose.msra.mxu0 0
        %537 = vmatprep.subr.bf16.mxu0 0
        %538 = vmatpush1.bf16.xpose.msra.mxu0 0
        %539 = vmatprep.subr.bf16.mxu0 0
        %540 = vmatpush1.bf16.xpose.msra.mxu0 0
        %541 = vmatprep.subr.bf16.mxu0 0
        %542 = vmatpush1.bf16.xpose.msra.mxu0 0
        %543 = vmatprep.subr.bf16.mxu0 0
        %544 = vmatpush1.bf16.xpose.msra.mxu0 0
        %545 = vmatprep.subr.bf16.mxu0 0
        %546 = vmatpush1.bf16.xpose.msra.mxu0 0
        %547 = vmatprep.subr.bf16.mxu0 0
        %548 = vmatpush1.bf16.xpose.msra.mxu0 0
        %549 = vmatprep.subr.bf16.mxu0 0
        %550 = vmatpush1.bf16.xpose.msra.mxu0 0
        %551 = vmatprep.subr.bf16.mxu0 0
        %552 = vmatpush1.bf16.xpose.msra.mxu0 0
        %553 = vmatprep.subr.bf16.mxu0 0
        %554 = vmatpush1.bf16.xpose.msra.mxu0 0
        %555 = vmatprep.subr.bf16.mxu0 0
        %556 = vmatpush1.bf16.xpose.msra.mxu0 0
        %557 = vmatprep.subr.bf16.mxu0 0
        %558 = vmatpush1.bf16.xpose.msra.mxu0 0
        %559 = vmatprep.mubr.bf16.mxu0 0
        %560 = vmatmul.mubr.bf16.gmra.mrb[0].mxu0 %v522
        %v561 = vpop.f32.mrb[0].mxu0
        %v562 = vadd.f32 %v518, %v561
        %v563 = vpop.f32.mrb[0].mxu0
        %v564 = vpop.f32.mrb[0].mxu0
        %v565 = vpop.f32.mrb[0].mxu0
        %566 = vdwg.mxu0
        %v568 = vsel %vm520, %v502, 0
        %v571 = vsel %vm520, %v506, 0
        %573 = vmatprep.subr.bf16.mxu0 0
        %574 = vmatpush1.bf16.xpose.msra.mxu0 %v571
        %575 = vmatprep.subr.bf16.mxu0 0
        %576 = vmatpush1.bf16.xpose.msra.mxu0 0
        %577 = vmatprep.subr.bf16.mxu0 0
        %578 = vmatpush1.bf16.xpose.msra.mxu0 0
        %579 = vmatprep.subr.bf16.mxu0 0
        %580 = vmatpush1.bf16.xpose.msra.mxu0 0
        %581 = vmatprep.subr.bf16.mxu0 0
        %582 = vmatpush1.bf16.xpose.msra.mxu0 0
        %583 = vmatprep.subr.bf16.mxu0 0
        %584 = vmatpush1.bf16.xpose.msra.mxu0 0
        %585 = vmatprep.subr.bf16.mxu0 0
        %586 = vmatpush1.bf16.xpose.msra.mxu0 0
        %587 = vmatprep.subr.bf16.mxu0 0
        %588 = vmatpush1.bf16.xpose.msra.mxu0 0
        %589 = vmatprep.subr.bf16.mxu0 0
        %590 = vmatpush1.bf16.xpose.msra.mxu0 0
        %591 = vmatprep.subr.bf16.mxu0 0
        %592 = vmatpush1.bf16.xpose.msra.mxu0 0
        %593 = vmatprep.subr.bf16.mxu0 0
        %594 = vmatpush1.bf16.xpose.msra.mxu0 0
        %595 = vmatprep.subr.bf16.mxu0 0
        %596 = vmatpush1.bf16.xpose.msra.mxu0 0
        %597 = vmatprep.subr.bf16.mxu0 0
        %598 = vmatpush1.bf16.xpose.msra.mxu0 0
        %599 = vmatprep.subr.bf16.mxu0 0
        %600 = vmatpush1.bf16.xpose.msra.mxu0 0
        %601 = vmatprep.subr.bf16.mxu0 0
        %602 = vmatpush1.bf16.xpose.msra.mxu0 0
        %603 = vmatprep.subr.bf16.mxu0 0
        %604 = vmatpush1.bf16.xpose.msra.mxu0 0
        %605 = vmatprep.mubr.bf16.mxu0 0
        %606 = vmatmul.mubr.bf16.gmra.mrb[0].mxu0 %v568
        %v607 = vpop.f32.mrb[0].mxu0
        %v608 = vadd.f32 %v518, %v607
        %v609 = vpop.f32.mrb[0].mxu0
        %v610 = vpop.f32.mrb[0].mxu0
        %v611 = vpop.f32.mrb[0].mxu0
        %612 = vdwg.mxu0
        %v614 = vsel %vm520, %v503, 0
        %v617 = vsel %vm520, %v507, 0
        %619 = vmatprep.subr.bf16.mxu0 0
        %620 = vmatpush1.bf16.xpose.msra.mxu0 %v617
        %621 = vmatprep.subr.bf16.mxu0 0
        %622 = vmatpush1.bf16.xpose.msra.mxu0 0
        %623 = vmatprep.subr.bf16.mxu0 0
        %624 = vmatpush1.bf16.xpose.msra.mxu0 0
        %625 = vmatprep.subr.bf16.mxu0 0
        %626 = vmatpush1.bf16.xpose.msra.mxu0 0
        %627 = vmatprep.subr.bf16.mxu0 0
        %628 = vmatpush1.bf16.xpose.msra.mxu0 0
        %629 = vmatprep.subr.bf16.mxu0 0
        %630 = vmatpush1.bf16.xpose.msra.mxu0 0
        %631 = vmatprep.subr.bf16.mxu0 0
        %632 = vmatpush1.bf16.xpose.msra.mxu0 0
        %633 = vmatprep.subr.bf16.mxu0 0
        %634 = vmatpush1.bf16.xpose.msra.mxu0 0
        %635 = vmatprep.subr.bf16.mxu0 0
        %636 = vmatpush1.bf16.xpose.msra.mxu0 0
        %637 = vmatprep.subr.bf16.mxu0 0
        %638 = vmatpush1.bf16.xpose.msra.mxu0 0
        %639 = vmatprep.subr.bf16.mxu0 0
        %640 = vmatpush1.bf16.xpose.msra.mxu0 0
        %641 = vmatprep.subr.bf16.mxu0 0
        %642 = vmatpush1.bf16.xpose.msra.mxu0 0
        %643 = vmatprep.subr.bf16.mxu0 0
        %644 = vmatpush1.bf16.xpose.msra.mxu0 0
        %645 = vmatprep.subr.bf16.mxu0 0
        %646 = vmatpush1.bf16.xpose.msra.mxu0 0
        %647 = vmatprep.subr.bf16.mxu0 0
        %648 = vmatpush1.bf16.xpose.msra.mxu0 0
        %649 = vmatprep.subr.bf16.mxu0 0
        %650 = vmatpush1.bf16.xpose.msra.mxu0 0
        %651 = vmatprep.mubr.bf16.mxu0 0
        %652 = vmatmul.mubr.bf16.gmra.mrb[0].mxu0 %v614
        %v653 = vpop.f32.mrb[0].mxu0
        %v654 = vadd.f32 %v518, %v653
        %v655 = vpop.f32.mrb[0].mxu0
        %v656 = vpop.f32.mrb[0].mxu0
        %v657 = vpop.f32.mrb[0].mxu0
        %658 = vdwg.mxu0
        %v660 = vsel %vm520, %v504, 0
        %v663 = vsel %vm520, %v508, 0
        %665 = vmatprep.subr.bf16.mxu0 0
        %666 = vmatpush1.bf16.xpose.msra.mxu0 %v663
        %667 = vmatprep.subr.bf16.mxu0 0
        %668 = vmatpush1.bf16.xpose.msra.mxu0 0
        %669 = vmatprep.subr.bf16.mxu0 0
        %670 = vmatpush1.bf16.xpose.msra.mxu0 0
        %671 = vmatprep.subr.bf16.mxu0 0
        %672 = vmatpush1.bf16.xpose.msra.mxu0 0
        %673 = vmatprep.subr.bf16.mxu0 0
        %674 = vmatpush1.bf16.xpose.msra.mxu0 0
        %675 = vmatprep.subr.bf16.mxu0 0
        %676 = vmatpush1.bf16.xpose.msra.mxu0 0
        %677 = vmatprep.subr.bf16.mxu0 0
        %678 = vmatpush1.bf16.xpose.msra.mxu0 0
        %679 = vmatprep.subr.bf16.mxu0 0
        %680 = vmatpush1.bf16.xpose.msra.mxu0 0
        %681 = vmatprep.subr.bf16.mxu0 0
        %682 = vmatpush1.bf16.xpose.msra.mxu0 0
        %683 = vmatprep.subr.bf16.mxu0 0
        %684 = vmatpush1.bf16.xpose.msra.mxu0 0
        %685 = vmatprep.subr.bf16.mxu0 0
        %686 = vmatpush1.bf16.xpose.msra.mxu0 0
        %687 = vmatprep.subr.bf16.mxu0 0
        %688 = vmatpush1.bf16.xpose.msra.mxu0 0
        %689 = vmatprep.subr.bf16.mxu0 0
        %690 = vmatpush1.bf16.xpose.msra.mxu0 0
        %691 = vmatprep.subr.bf16.mxu0 0
        %692 = vmatpush1.bf16.xpose.msra.mxu0 0
        %693 = vmatprep.subr.bf16.mxu0 0
        %694 = vmatpush1.bf16.xpose.msra.mxu0 0
        %695 = vmatprep.subr.bf16.mxu0 0
        %696 = vmatpush1.bf16.xpose.msra.mxu0 0
        %697 = vmatprep.mubr.bf16.mxu0 0
        %698 = vmatmul.mubr.bf16.gmra.mrb[0].mxu0 %v660
        %v699 = vpop.f32.mrb[0].mxu0
        %v700 = vadd.f32 %v518, %v699
        %v701 = vpop.f32.mrb[0].mxu0
        %v702 = vpop.f32.mrb[0].mxu0
        %v703 = vpop.f32.mrb[0].mxu0
        %704 = vdwg.mxu0
        %v705 = vsel %vm520, %v562, -inf
        %706 = vmax.xlane.f32.xlu0 %v705
        %v707 = vpop.xlane.xlu0 %706
        %v708 = vsel %vm520, %v608, -inf
        %709 = vmax.xlane.f32.xlu0 %v708
        %v710 = vpop.xlane.xlu0 %709
        %v711 = vsel %vm520, %v654, -inf
        %712 = vmax.xlane.f32.xlu0 %v711
        %v713 = vpop.xlane.xlu0 %712
        %v714 = vsel %vm520, %v700, -inf
        %715 = vmax.xlane.f32.xlu0 %v714
        %v716 = vpop.xlane.xlu0 %715
        %v717 = vsub.f32 %v562, %v707
        %v718 = vsub.f32 %v608, %v710
        %v719 = vsub.f32 %v654, %v713
        %v720 = vsub.f32 %v700, %v716
        %v721 = vmul.f32 %v717, 1.442695
        %v722 = vpow.pop %v721
        %v723 = vmul.f32 %v718, 1.442695
        %v724 = vpow.pop %v723
        %v725 = vmul.f32 %v719, 1.442695
        %v726 = vpow.pop %v725
        %v727 = vmul.f32 %v720, 1.442695
        %v728 = vpow.pop %v727
        %v729 = vsel %vm520, %v722, 0.0
        %730 = vadd.xlane.f32.xlu0 %v729
        %v731 = vpop.xlane.xlu0 %730
        %v732 = vsel %vm520, %v724, 0.0
        %733 = vadd.xlane.f32.xlu0 %v732
        %v734 = vpop.xlane.xlu0 %733
        %v735 = vsel %vm520, %v726, 0.0
        %736 = vadd.xlane.f32.xlu0 %v735
        %v737 = vpop.xlane.xlu0 %736
        %v738 = vsel %vm520, %v728, 0.0
        %739 = vadd.xlane.f32.xlu0 %v738
        %v740 = vpop.xlane.xlu0 %739
        %v741 = vrcp.pop %v731
        %v742 = vrcp.pop %v734
        %v743 = vrcp.pop %v737
        %v744 = vrcp.pop %v740
        %v745 = vmul.f32 %v722, %v741
        %v746 = vmul.f32 %v724, %v742
        %v747 = vmul.f32 %v726, %v743
        %v748 = vmul.f32 %v728, %v744
        %v749 = vpack.c.bf16 %v745, %v745
        %v750 = vpack.c.bf16 %v746, %v746
        %v751 = vpack.c.bf16 %v747, %v747
        %v752 = vpack.c.bf16 %v748, %v748
        %v754 = vsel %vm520, %v749, 0
        %vm756 = vcmask 1043456
        %v758 = vsel %vm756, %v509, 0
        %760 = vmatprep.subr.bf16.mxu0 0
        %761 = vmatpush1.bf16.msra.mxu0 %v758
        %762 = vmatprep.subr.bf16.mxu0 0
        %763 = vmatpush1.bf16.msra.mxu0 0
        %764 = vmatprep.subr.bf16.mxu0 0
        %765 = vmatpush1.bf16.msra.mxu0 0
        %766 = vmatprep.subr.bf16.mxu0 0
        %767 = vmatpush1.bf16.msra.mxu0 0
        %768 = vmatprep.subr.bf16.mxu0 0
        %769 = vmatpush1.bf16.msra.mxu0 0
        %770 = vmatprep.subr.bf16.mxu0 0
        %771 = vmatpush1.bf16.msra.mxu0 0
        %772 = vmatprep.subr.bf16.mxu0 0
        %773 = vmatpush1.bf16.msra.mxu0 0
        %774 = vmatprep.subr.bf16.mxu0 0
        %775 = vmatpush1.bf16.msra.mxu0 0
        %776 = vmatprep.subr.bf16.mxu0 0
        %777 = vmatpush1.bf16.msra.mxu0 0
        %778 = vmatprep.subr.bf16.mxu0 0
        %779 = vmatpush1.bf16.msra.mxu0 0
        %780 = vmatprep.subr.bf16.mxu0 0
        %781 = vmatpush1.bf16.msra.mxu0 0
        %782 = vmatprep.subr.bf16.mxu0 0
        %783 = vmatpush1.bf16.msra.mxu0 0
        %784 = vmatprep.subr.bf16.mxu0 0
        %785 = vmatpush1.bf16.msra.mxu0 0
        %786 = vmatprep.subr.bf16.mxu0 0
        %787 = vmatpush1.bf16.msra.mxu0 0
        %788 = vmatprep.subr.bf16.mxu0 0
        %789 = vmatpush1.bf16.msra.mxu0 0
        %790 = vmatprep.subr.bf16.mxu0 0
        %791 = vmatpush1.bf16.msra.mxu0 0
        %792 = vmatprep.mubr.bf16.mxu0 0
        %793 = vmatmul.mubr.bf16.gmra.mrb[0].mxu0 %v754
        %v794 = vpop.f32.mrb[0].mxu0
        %v795 = vadd.f32 0.0, %v794
        %v796 = vpop.f32.mrb[0].mxu0
        %v797 = vpop.f32.mrb[0].mxu0
        %v798 = vpop.f32.mrb[0].mxu0
        %799 = vdwg.mxu0
        %v801 = vsel %vm520, %v750, 0
        %v804 = vsel %vm756, %v510, 0
        %806 = vmatprep.subr.bf16.mxu0 0
        %807 = vmatpush1.bf16.msra.mxu0 %v804
        %808 = vmatprep.subr.bf16.mxu0 0
        %809 = vmatpush1.bf16.msra.mxu0 0
        %810 = vmatprep.subr.bf16.mxu0 0
        %811 = vmatpush1.bf16.msra.mxu0 0
        %812 = vmatprep.subr.bf16.mxu0 0
        %813 = vmatpush1.bf16.msra.mxu0 0
        %814 = vmatprep.subr.bf16.mxu0 0
        %815 = vmatpush1.bf16.msra.mxu0 0
        %816 = vmatprep.subr.bf16.mxu0 0
        %817 = vmatpush1.bf16.msra.mxu0 0
        %818 = vmatprep.subr.bf16.mxu0 0
        %819 = vmatpush1.bf16.msra.mxu0 0
        %820 = vmatprep.subr.bf16.mxu0 0
        %821 = vmatpush1.bf16.msra.mxu0 0
        %822 = vmatprep.subr.bf16.mxu0 0
        %823 = vmatpush1.bf16.msra.mxu0 0
        %824 = vmatprep.subr.bf16.mxu0 0
        %825 = vmatpush1.bf16.msra.mxu0 0
        %826 = vmatprep.subr.bf16.mxu0 0
        %827 = vmatpush1.bf16.msra.mxu0 0
        %828 = vmatprep.subr.bf16.mxu0 0
        %829 = vmatpush1.bf16.msra.mxu0 0
        %830 = vmatprep.subr.bf16.mxu0 0
        %831 = vmatpush1.bf16.msra.mxu0 0
        %832 = vmatprep.subr.bf16.mxu0 0
        %833 = vmatpush1.bf16.msra.mxu0 0
        %834 = vmatprep.subr.bf16.mxu0 0
        %835 = vmatpush1.bf16.msra.mxu0 0
        %836 = vmatprep.subr.bf16.mxu0 0
        %837 = vmatpush1.bf16.msra.mxu0 0
        %838 = vmatprep.mubr.bf16.mxu0 0
        %839 = vmatmul.mubr.bf16.gmra.mrb[0].mxu0 %v801
        %v840 = vpop.f32.mrb[0].mxu0
        %v841 = vadd.f32 0.0, %v840
        %v842 = vpop.f32.mrb[0].mxu0
        %v843 = vpop.f32.mrb[0].mxu0
        %v844 = vpop.f32.mrb[0].mxu0
        %845 = vdwg.mxu0
        %v847 = vsel %vm520, %v751, 0
        %v850 = vsel %vm756, %v511, 0
        %852 = vmatprep.subr.bf16.mxu0 0
        %853 = vmatpush1.bf16.msra.mxu0 %v850
        %854 = vmatprep.subr.bf16.mxu0 0
        %855 = vmatpush1.bf16.msra.mxu0 0
        %856 = vmatprep.subr.bf16.mxu0 0
        %857 = vmatpush1.bf16.msra.mxu0 0
        %858 = vmatprep.subr.bf16.mxu0 0
        %859 = vmatpush1.bf16.msra.mxu0 0
        %860 = vmatprep.subr.bf16.mxu0 0
        %861 = vmatpush1.bf16.msra.mxu0 0
        %862 = vmatprep.subr.bf16.mxu0 0
        %863 = vmatpush1.bf16.msra.mxu0 0
        %864 = vmatprep.subr.bf16.mxu0 0
        %865 = vmatpush1.bf16.msra.mxu0 0
        %866 = vmatprep.subr.bf16.mxu0 0
        %867 = vmatpush1.bf16.msra.mxu0 0
        %868 = vmatprep.subr.bf16.mxu0 0
        %869 = vmatpush1.bf16.msra.mxu0 0
        %870 = vmatprep.subr.bf16.mxu0 0
        %871 = vmatpush1.bf16.msra.mxu0 0
        %872 = vmatprep.subr.bf16.mxu0 0
        %873 = vmatpush1.bf16.msra.mxu0 0
        %874 = vmatprep.subr.bf16.mxu0 0
        %875 = vmatpush1.bf16.msra.mxu0 0
        %876 = vmatprep.subr.bf16.mxu0 0
        %877 = vmatpush1.bf16.msra.mxu0 0
        %878 = vmatprep.subr.bf16.mxu0 0
        %879 = vmatpush1.bf16.msra.mxu0 0
        %880 = vmatprep.subr.bf16.mxu0 0
        %881 = vmatpush1.bf16.msra.mxu0 0
        %882 = vmatprep.subr.bf16.mxu0 0
        %883 = vmatpush1.bf16.msra.mxu0 0
        %884 = vmatprep.mubr.bf16.mxu0 0
        %885 = vmatmul.mubr.bf16.gmra.mrb[0].mxu0 %v847
        %v886 = vpop.f32.mrb[0].mxu0
        %v887 = vadd.f32 0.0, %v886
        %v888 = vpop.f32.mrb[0].mxu0
        %v889 = vpop.f32.mrb[0].mxu0
        %v890 = vpop.f32.mrb[0].mxu0
        %891 = vdwg.mxu0
        %v893 = vsel %vm520, %v752, 0
        %v896 = vsel %vm756, %v512, 0
        %898 = vmatprep.subr.bf16.mxu0 0
        %899 = vmatpush1.bf16.msra.mxu0 %v896
        %900 = vmatprep.subr.bf16.mxu0 0
        %901 = vmatpush1.bf16.msra.mxu0 0
        %902 = vmatprep.subr.bf16.mxu0 0
        %903 = vmatpush1.bf16.msra.mxu0 0
        %904 = vmatprep.subr.bf16.mxu0 0
        %905 = vmatpush1.bf16.msra.mxu0 0
        %906 = vmatprep.subr.bf16.mxu0 0
        %907 = vmatpush1.bf16.msra.mxu0 0
        %908 = vmatprep.subr.bf16.mxu0 0
        %909 = vmatpush1.bf16.msra.mxu0 0
        %910 = vmatprep.subr.bf16.mxu0 0
        %911 = vmatpush1.bf16.msra.mxu0 0
        %912 = vmatprep.subr.bf16.mxu0 0
        %913 = vmatpush1.bf16.msra.mxu0 0
        %914 = vmatprep.subr.bf16.mxu0 0
        %915 = vmatpush1.bf16.msra.mxu0 0
        %916 = vmatprep.subr.bf16.mxu0 0
        %917 = vmatpush1.bf16.msra.mxu0 0
        %918 = vmatprep.subr.bf16.mxu0 0
        %919 = vmatpush1.bf16.msra.mxu0 0
        %920 = vmatprep.subr.bf16.mxu0 0
        %921 = vmatpush1.bf16.msra.mxu0 0
        %922 = vmatprep.subr.bf16.mxu0 0
        %923 = vmatpush1.bf16.msra.mxu0 0
        %924 = vmatprep.subr.bf16.mxu0 0
        %925 = vmatpush1.bf16.msra.mxu0 0
        %926 = vmatprep.subr.bf16.mxu0 0
        %927 = vmatpush1.bf16.msra.mxu0 0
        %928 = vmatprep.subr.bf16.mxu0 0
        %929 = vmatpush1.bf16.msra.mxu0 0
        %930 = vmatprep.mubr.bf16.mxu0 0
        %931 = vmatmul.mubr.bf16.gmra.mrb[0].mxu0 %v893
        %v932 = vpop.f32.mrb[0].mxu0
        %v933 = vadd.f32 0.0, %v932
        %v934 = vpop.f32.mrb[0].mxu0
        %v935 = vpop.f32.mrb[0].mxu0
        %v936 = vpop.f32.mrb[0].mxu0
        %937 = vdwg.mxu0
        %v938 = vpack.c.bf16 %v795, %v795
        %v939 = vpack.c.bf16 %v841, %v841
        %v940 = vpack.c.bf16 %v887, %v887
        %v941 = vpack.c.bf16 %v933, %v933
        %v942 = vld [vmem:[%s5] sm:$0xf]
        %s943 = scalar_lea.vmem %s5, 4
        %v944 = vld [vmem:[%s943] sm:$0xf]
        %v946 = vsel %vm520, %v939, 0
        %v949 = vsel %vm756, %v944, 0
        %951 = vmatprep.subr.bf16.mxu0 0
        %952 = vmatpush1.bf16.msra.mxu0 %v949
        %953 = vmatprep.subr.bf16.mxu0 0
        %954 = vmatpush1.bf16.msra.mxu0 0
        %955 = vmatprep.subr.bf16.mxu0 0
        %956 = vmatpush1.bf16.msra.mxu0 0
        %957 = vmatprep.subr.bf16.mxu0 0
        %958 = vmatpush1.bf16.msra.mxu0 0
        %959 = vmatprep.subr.bf16.mxu0 0
        %960 = vmatpush1.bf16.msra.mxu0 0
        %961 = vmatprep.subr.bf16.mxu0 0
        %962 = vmatpush1.bf16.msra.mxu0 0
        %963 = vmatprep.subr.bf16.mxu0 0
        %964 = vmatpush1.bf16.msra.mxu0 0
        %965 = vmatprep.subr.bf16.mxu0 0
        %966 = vmatpush1.bf16.msra.mxu0 0
        %967 = vmatprep.subr.bf16.mxu0 0
        %968 = vmatpush1.bf16.msra.mxu0 0
        %969 = vmatprep.subr.bf16.mxu0 0
        %970 = vmatpush1.bf16.msra.mxu0 0
        %971 = vmatprep.subr.bf16.mxu0 0
        %972 = vmatpush1.bf16.msra.mxu0 0
        %973 = vmatprep.subr.bf16.mxu0 0
        %974 = vmatpush1.bf16.msra.mxu0 0
        %975 = vmatprep.subr.bf16.mxu0 0
        %976 = vmatpush1.bf16.msra.mxu0 0
        %977 = vmatprep.subr.bf16.mxu0 0
        %978 = vmatpush1.bf16.msra.mxu0 0
        %979 = vmatprep.subr.bf16.mxu0 0
        %980 = vmatpush1.bf16.msra.mxu0 0
        %981 = vmatprep.subr.bf16.mxu0 0
        %982 = vmatpush1.bf16.msra.mxu0 0
        %983 = vmatprep.mubr.bf16.mxu0 0
        %984 = vmatmul.mubr.bf16.gmra.mrb[0].mxu0 %v946
        %v985 = vpop.f32.mrb[0].mxu0
        %v986 = vadd.f32 0.0, %v985
        %v987 = vpop.f32.mrb[0].mxu0
        %v988 = vpop.f32.mrb[0].mxu0
        %v989 = vpop.f32.mrb[0].mxu0
        %990 = vdwg.mxu0
        %v992 = vsel %vm520, %v938, 0
        %v995 = vsel %vm756, %v942, 0
        %997 = vmatprep.subr.bf16.mxu0 0
        %998 = vmatpush1.bf16.msra.mxu0 %v995
        %999 = vmatprep.subr.bf16.mxu0 0
        %1000 = vmatpush1.bf16.msra.mxu0 0
        %1001 = vmatprep.subr.bf16.mxu0 0
        %1002 = vmatpush1.bf16.msra.mxu0 0
        %1003 = vmatprep.subr.bf16.mxu0 0
        %1004 = vmatpush1.bf16.msra.mxu0 0
        %1005 = vmatprep.subr.bf16.mxu0 0
        %1006 = vmatpush1.bf16.msra.mxu0 0
        %1007 = vmatprep.subr.bf16.mxu0 0
        %1008 = vmatpush1.bf16.msra.mxu0 0
        %1009 = vmatprep.subr.bf16.mxu0 0
        %1010 = vmatpush1.bf16.msra.mxu0 0
        %1011 = vmatprep.subr.bf16.mxu0 0
        %1012 = vmatpush1.bf16.msra.mxu0 0
        %1013 = vmatprep.subr.bf16.mxu0 0
        %1014 = vmatpush1.bf16.msra.mxu0 0
        %1015 = vmatprep.subr.bf16.mxu0 0
        %1016 = vmatpush1.bf16.msra.mxu0 0
        %1017 = vmatprep.subr.bf16.mxu0 0
        %1018 = vmatpush1.bf16.msra.mxu0 0
        %1019 = vmatprep.subr.bf16.mxu0 0
        %1020 = vmatpush1.bf16.msra.mxu0 0
        %1021 = vmatprep.subr.bf16.mxu0 0
        %1022 = vmatpush1.bf16.msra.mxu0 0
        %1023 = vmatprep.subr.bf16.mxu0 0
        %1024 = vmatpush1.bf16.msra.mxu0 0
        %1025 = vmatprep.subr.bf16.mxu0 0
        %1026 = vmatpush1.bf16.msra.mxu0 0
        %1027 = vmatprep.subr.bf16.mxu0 0
        %1028 = vmatpush1.bf16.msra.mxu0 0
        %1029 = vmatprep.mubr.bf16.mxu0 0
        %1030 = vmatmul.mubr.bf16.gmra.mrb[0].mxu0 %v992
        %v1031 = vpop.f32.mrb[0].mxu0
        %v1032 = vadd.f32 %v986, %v1031
        %v1033 = vpop.f32.mrb[0].mxu0
        %v1034 = vpop.f32.mrb[0].mxu0
        %v1035 = vpop.f32.mrb[0].mxu0
        %1036 = vdwg.mxu0
        %s1037 = scalar_lea.vmem %s5, 8
        %v1038 = vld [vmem:[%s1037] sm:$0xf]
        %v1040 = vsel %vm520, %v940, 0
        %v1043 = vsel %vm756, %v1038, 0
        %1045 = vmatprep.subr.bf16.mxu0 0
        %1046 = vmatpush1.bf16.msra.mxu0 %v1043
        %1047 = vmatprep.subr.bf16.mxu0 0
        %1048 = vmatpush1.bf16.msra.mxu0 0
        %1049 = vmatprep.subr.bf16.mxu0 0
        %1050 = vmatpush1.bf16.msra.mxu0 0
        %1051 = vmatprep.subr.bf16.mxu0 0
        %1052 = vmatpush1.bf16.msra.mxu0 0
        %1053 = vmatprep.subr.bf16.mxu0 0
        %1054 = vmatpush1.bf16.msra.mxu0 0
        %1055 = vmatprep.subr.bf16.mxu0 0
        %1056 = vmatpush1.bf16.msra.mxu0 0
        %1057 = vmatprep.subr.bf16.mxu0 0
        %1058 = vmatpush1.bf16.msra.mxu0 0
        %1059 = vmatprep.subr.bf16.mxu0 0
        %1060 = vmatpush1.bf16.msra.mxu0 0
        %1061 = vmatprep.subr.bf16.mxu0 0
        %1062 = vmatpush1.bf16.msra.mxu0 0
        %1063 = vmatprep.subr.bf16.mxu0 0
        %1064 = vmatpush1.bf16.msra.mxu0 0
        %1065 = vmatprep.subr.bf16.mxu0 0
        %1066 = vmatpush1.bf16.msra.mxu0 0
        %1067 = vmatprep.subr.bf16.mxu0 0
        %1068 = vmatpush1.bf16.msra.mxu0 0
        %1069 = vmatprep.subr.bf16.mxu0 0
        %1070 = vmatpush1.bf16.msra.mxu0 0
        %1071 = vmatprep.subr.bf16.mxu0 0
        %1072 = vmatpush1.bf16.msra.mxu0 0
        %1073 = vmatprep.subr.bf16.mxu0 0
        %1074 = vmatpush1.bf16.msra.mxu0 0
        %1075 = vmatprep.subr.bf16.mxu0 0
        %1076 = vmatpush1.bf16.msra.mxu0 0
        %1077 = vmatprep.mubr.bf16.mxu0 0
        %1078 = vmatmul.mubr.bf16.gmra.mrb[0].mxu0 %v1040
        %v1079 = vpop.f32.mrb[0].mxu0
        %v1080 = vadd.f32 0.0, %v1079
        %v1081 = vpop.f32.mrb[0].mxu0
        %v1082 = vpop.f32.mrb[0].mxu0
        %v1083 = vpop.f32.mrb[0].mxu0
        %1084 = vdwg.mxu0
        %v1085 = vadd.f32 %v1032, %v1080
        %s1086 = scalar_lea.vmem %s5, 12
        %v1087 = vld [vmem:[%s1086] sm:$0xf]
        %v1089 = vsel %vm520, %v941, 0
        %v1092 = vsel %vm756, %v1087, 0
        %1094 = vmatprep.subr.bf16.mxu0 0
        %1095 = vmatpush1.bf16.msra.mxu0 %v1092
        %1096 = vmatprep.subr.bf16.mxu0 0
        %1097 = vmatpush1.bf16.msra.mxu0 0
        %1098 = vmatprep.subr.bf16.mxu0 0
        %1099 = vmatpush1.bf16.msra.mxu0 0
        %1100 = vmatprep.subr.bf16.mxu0 0
        %1101 = vmatpush1.bf16.msra.mxu0 0
        %1102 = vmatprep.subr.bf16.mxu0 0
        %1103 = vmatpush1.bf16.msra.mxu0 0
        %1104 = vmatprep.subr.bf16.mxu0 0
        %1105 = vmatpush1.bf16.msra.mxu0 0
        %1106 = vmatprep.subr.bf16.mxu0 0
        %1107 = vmatpush1.bf16.msra.mxu0 0
        %1108 = vmatprep.subr.bf16.mxu0 0
        %1109 = vmatpush1.bf16.msra.mxu0 0
        %1110 = vmatprep.subr.bf16.mxu0 0
        %1111 = vmatpush1.bf16.msra.mxu0 0
        %1112 = vmatprep.subr.bf16.mxu0 0
        %1113 = vmatpush1.bf16.msra.mxu0 0
        %1114 = vmatprep.subr.bf16.mxu0 0
        %1115 = vmatpush1.bf16.msra.mxu0 0
        %1116 = vmatprep.subr.bf16.mxu0 0
        %1117 = vmatpush1.bf16.msra.mxu0 0
        %1118 = vmatprep.subr.bf16.mxu0 0
        %1119 = vmatpush1.bf16.msra.mxu0 0
        %1120 = vmatprep.subr.bf16.mxu0 0
        %1121 = vmatpush1.bf16.msra.mxu0 0
        %1122 = vmatprep.subr.bf16.mxu0 0
        %1123 = vmatpush1.bf16.msra.mxu0 0
        %1124 = vmatprep.subr.bf16.mxu0 0
        %1125 = vmatpush1.bf16.msra.mxu0 0
        %1126 = vmatprep.mubr.bf16.mxu0 0
        %1127 = vmatmul.mubr.bf16.gmra.mrb[0].mxu0 %v1089
        %v1128 = vpop.f32.mrb[0].mxu0
        %v1129 = vadd.f32 0.0, %v1128
        %v1130 = vpop.f32.mrb[0].mxu0
        %v1131 = vpop.f32.mrb[0].mxu0
        %v1132 = vpop.f32.mrb[0].mxu0
        %1133 = vdwg.mxu0
        %v1134 = vadd.f32 %v1085, %v1129
        %v1135 = vld [vmem:[%s6] sm:$0x1]
        %v1137 = vlaneseq
        %v1138 = vshrl.u32 %v1137, 7
        %v1139 = vsub.s32 0, %v1138
        %v1140 = vrot.slane %v1135, %v1139
        %v1142 = vadd.f32 %v1134, %v1140
        %v1143 = vadd.f32 %v1142, %v500
        %vm1144 = vcmask 261120
        %v1145 = vsel %vm1144, %v1143, 0.0
        %1146 = vadd.xlane.f32.xlu0 %v1145
        %v1147 = vpop.xlane.xlu0 %1146
        %v1148 = vrcp.pop 32.0
        %v1149 = vmul.f32 %v1147, %v1148
        %v1150 = vsub.f32 %v1143, %v1149
        %v1151 = vmul.f32 %v1150, %v1150
        %v1152 = vsel %vm1144, %v1151, 0.0
        %1153 = vadd.xlane.f32.xlu0 %v1152
        %v1154 = vpop.xlane.xlu0 %1153
        %v1155 = vmul.f32 %v1154, %v1148
        %v1156 = vadd.f32 %v1155, 1e-12
        %v1157 = vrsqrt.pop %v1156
        %v1158 = vmul.f32 %v1150, %v1157
        %v1159 = vld [vmem:[%s7] sm:$0x1]
        %v1161 = vlaneseq
        %v1162 = vshrl.u32 %v1161, 7
        %v1163 = vsub.s32 0, %v1162
        %v1164 = vrot.slane %v1159, %v1163
        %v1166 = vmul.f32 %v1158, %v1164
        %v1167 = vld [vmem:[%s8] sm:$0x1]
        %v1169 = vlaneseq
        %v1170 = vshrl.u32 %v1169, 7
        %v1171 = vsub.s32 0, %v1170
        %v1172 = vrot.slane %v1167, %v1171
        %v1174 = vadd.f32 %v1166, %v1172
        %1175 = vst.msk [vmem:[%s495] sm:$0xff] %vm1144, %v1174
        %s1176 = sand.u32 %s272, 1
        %s1177 = scalar_lea.sflag [#allocation4], %s1176
        %s1178 = sand.u32 %s272, 1
        %s1179 = smul.addr %s1178, 8
        %s1180 = scalar_lea.vmem [#allocation10], %s1179
        // Predicated region
        $region73: #{tpu_custom_call.1} parent=55 // pred_check
          %p1181 = pneg %p282
        $region74: #{tpu_custom_call.1} parent=55 // pred_check_branch
          %1183 = sbr.rel (%p1181) target = $region76
        $region75: #{tpu_custom_call.1} parent=55 // pred_region
          %s1185 = ssub.s32 128, 128
          %1186 = vsyncadd %s1177, %s1185
          %s1187 = sadd.s32 %s37, %s36
          %s1188 = smul.addr %s1187, 128
          %s1189 = scalar_lea.hbm %s9, %s1188
          %s1191 = sshll.u32 %s1180, 4
          %s1192 = int_to_ptr.vmem [resolvable:$true] %s1191
          %1194 = dma.vmem_to_hbm [thread:$0]  %s1192, 128, %s1189, %s1177
        $region76: #{tpu_custom_call.1} parent=55 // pred_fallthru
          _
      $region56: #{tpu_custom_call.1} parent=5 // pred_fallthru
        _
      %p1195 = scmp.le.s32.totalorder 2, %s27
      // Predicated region
      $region77: #{tpu_custom_call.1} parent=5 // pred_check
        %p1196 = pneg %p1195
      $region78: #{tpu_custom_call.1} parent=5 // pred_check_branch
        %1198 = sbr.rel (%p1196) target = $region80
      $region79: #{tpu_custom_call.1} parent=5 // pred_region
        %s1199 = ssub.s32 %s27, 2
        // Predicated region
        $region81: #{tpu_custom_call.1} parent=79 // pred_check
          %p1200 = pneg %p288
        $region82: #{tpu_custom_call.1} parent=79 // pred_check_branch
          %1202 = sbr.rel (%p1200) target = $region84
        $region83: #{tpu_custom_call.1} parent=79 // pred_region
          %s1203 = sand.u32 %s273, 1
          %s1204 = scalar_lea.sflag [#allocation4], %s1203
          %s1205 = sand.u32 %s273, 1
          %s1206 = smul.addr %s1205, 8
          %s1207 = scalar_lea.vmem [#allocation10], %s1206
          %1208 = dma.done %s1204, 128
        $region84: #{tpu_custom_call.1} parent=79 // pred_fallthru
          _
      $region80: #{tpu_custom_call.1} parent=5 // pred_fallthru
        _
    $region6: #{tpu_custom_call.1} parent=1 // loop_footer
      %s31 = sadd.s32 1, %s27
    $region7: #{tpu_custom_call.1} parent=1 // loop_footer_branch
      %26 = sbr.rel target = $region3
    $region8: #{tpu_custom_call.1} parent=1 // loop_exit
      _
    %1209 = vsyncpa [#allocation3], 1
    %s1210 = scalar_lea.sflag [#allocation3], 1
    %1211 = vsyncpa %s1210, 1
    %1212 = vsyncpa [#allocation6], 1
    %s1213 = scalar_lea.sflag [#allocation6], 1
    %1214 = vsyncpa %s1213, 1
    %1215 = vsyncpa [#allocation9], 1
    %s1216 = scalar_lea.sflag [#allocation9], 1
    %1217 = vsyncpa %s1216, 1
    %1218 = vsyncpa [#allocation4], 1
    %s1219 = scalar_lea.sflag [#allocation4], 1
    %1220 = vsyncpa %s1219, 1

</llo_original>
